<compile_context>
chip_gen: v6e
topology: v6e:2x2x1
jax: 0.10.0
libtpu: 0.0.40
codegen_flags: <defaults>
</compile_context>

<pallas_src>
import functools
import math

import jax
import jax.numpy as jnp
from jax import lax
from jax.experimental import pallas as pl
from jax.experimental.pallas import tpu as pltpu


# ----------------------------------------------------------------------------
# In-kernel helpers (pure jnp, trace into the kernel body)
# ----------------------------------------------------------------------------
def _erf(x):
    # Abramowitz & Stegun 7.1.26 rational approximation, max abs err ~1.5e-7.
    a1, a2, a3, a4, a5 = (0.254829592, -0.284496736, 1.421413741,
                          -1.453152027, 1.061405429)
    p = 0.3275911
    ax = jnp.abs(x)
    t = 1.0 / (1.0 + p * ax)
    poly = ((((a5 * t + a4) * t + a3) * t + a2) * t + a1) * t
    y = 1.0 - poly * jnp.exp(-ax * ax)
    return jnp.where(x >= 0, y, -y)


def _gelu_exact(x):
    return 0.5 * x * (1.0 + _erf(x * (1.0 / math.sqrt(2.0))))


def _layer_norm(v, w, b, eps=1e-5):
    # PyTorch LayerNorm: biased variance, eps inside sqrt.  f32 throughout.
    mu = jnp.mean(v, axis=-1, keepdims=True)
    var = jnp.mean((v - mu) ** 2, axis=-1, keepdims=True)
    return (v - mu) * lax.rsqrt(var + eps) * w + b


# ----------------------------------------------------------------------------
# Kernel: one grid step per batch element ("parallel" axis -> megacore on v7x)
# ----------------------------------------------------------------------------
def _block_kernel(x_ref, rope_ref,
                  ln1w_ref, ln1b_ref,
                  w5_ref, b5_ref,
                  wproj_ref, bproj_ref,
                  ln2w_ref, ln2b_ref,
                  wfc1_ref, bfc1_ref,
                  wfc2_ref, bfc2_ref,
                  out_ref,
                  y_scr,
                  *, num_heads, head_dim):
    f32, bf16 = jnp.float32, jnp.bfloat16
    H, hd = num_heads, head_dim

    x = x_ref[...]                                   # (T, D) f32, one batch elem
    T, D = x.shape

    # ---------------- attention branch ----------------
    h1 = _layer_norm(x, ln1w_ref[...], ln1b_ref[...])

    # Single fused MXU matmul producing [q*scale, rot(q)*scale, k, rot(k), v]
    # (scale and the RoPE "rotate" matrix are folded into the weights in the
    # wrapper: rotate(h@W+b) == h@(W@R) + b@R).
    qkv5 = jnp.dot(h1.astype(bf16), w5_ref[...],
                   preferred_element_type=f32) + b5_ref[...]     # (T, 5D)
    q, qrot = qkv5[:, 0 * D:1 * D], qkv5[:, 1 * D:2 * D]
    k, krot = qkv5[:, 2 * D:3 * D], qkv5[:, 3 * D:4 * D]
    v = qkv5[:, 4 * D:5 * D]

    rope = rope_ref[...]                              # (T, D) f32, grid-invariant
    omr = 1.0 - rope
    qr = q * rope + qrot * omr                        # faithful (non-standard) RoPE
    kr = k * rope + krot * omr

    # Head-major (H, T, hd) operands -> one batched dot_general over heads.
    qh = jnp.stack([qr[:, h * hd:(h + 1) * hd] for h in range(H)], 0).astype(bf16)
    kh = jnp.stack([kr[:, h * hd:(h + 1) * hd] for h in range(H)], 0).astype(bf16)
    vh = jnp.stack([v[:, h * hd:(h + 1) * hd] for h in range(H)], 0).astype(bf16)

    # Causal mask built in-kernel (no HBM mask input).
    qi = lax.broadcasted_iota(jnp.int32, (T, T), 0)
    ki = lax.broadcasted_iota(jnp.int32, (T, T), 1)
    allowed = qi >= ki                                # (T, T) bool

    s = jnp.einsum('hqd,hkd->hqk', qh, kh,
                   preferred_element_type=f32)        # (H, T, T)
    s = jnp.where(allowed[None, :, :], s, -1e30)      # finite bias, f32-safe
    s = s - jnp.max(s, axis=-1, keepdims=True)
    p = jnp.exp(s)
    p = p * pl.reciprocal(jnp.sum(p, axis=-1, keepdims=True), approx=True)

    y = jnp.einsum('hqk,hkd->hqd', p.astype(bf16), vh,
                   preferred_element_type=f32)        # (H, T, hd)

    # Assemble head outputs into a (T, D) VMEM scratch, then ONE projection.
    for h in range(H):
        y_scr[:, h * hd:(h + 1) * hd] = y[h]
    attn = jnp.dot(y_scr[...].astype(bf16), wproj_ref[...],
                   preferred_element_type=f32) + bproj_ref[...]

    x1 = x + attn                                     # residual 1

    # ---------------- MLP branch ----------------
    h2 = _layer_norm(x1, ln2w_ref[...], ln2b_ref[...])
    mid = jnp.dot(h2.astype(bf16), wfc1_ref[...],
                  preferred_element_type=f32) + bfc1_ref[...]
    mid = _gelu_exact(mid)                            # f32 elementwise path
    mlp = jnp.dot(mid.astype(bf16), wfc2_ref[...],
                  preferred_element_type=f32) + bfc2_ref[...]

    out_ref[...] = x1 + mlp                           # residual 2


# ----------------------------------------------------------------------------
# One-time weight / constant preparation (hoisted out of the forward path)
# ----------------------------------------------------------------------------
def prepare_block_params(params, num_heads, seq_len):
    f32, bf16 = jnp.float32, jnp.bfloat16
    D = params["w_qkv"].shape[0]
    H = num_heads
    hd = D // H
    T = seq_len
    scale = 1.0 / math.sqrt(hd)

    # Split the interleaved qkv weight into head-contiguous Q / K / V blocks
    # (head h -> columns [h*hd, (h+1)*hd)) and fold 1/sqrt(hd) into Q.
    w4 = params["w_qkv"].reshape(D, H, 3, hd)
    b4 = params["b_qkv"].reshape(1, H, 3, hd)
    w_q = w4[:, :, 0, :].reshape(D, D) * scale
    w_k = w4[:, :, 1, :].reshape(D, D)
    w_v = w4[:, :, 2, :].reshape(D, D)
    b_q = b4[:, :, 0, :].reshape(1, D) * scale
    b_k = b4[:, :, 1, :].reshape(1, D)
    b_v = b4[:, :, 2, :].reshape(1, D)

    # RoPE "rotate" as a (D, D) pair-swap matrix, folded into the weights.
    # Pairs (0,1),(2,3),... never cross head boundaries since hd is even.
    row = jnp.arange(D)[:, None]
    col = jnp.arange(D)[None, :]
    R = jnp.where((row == col + 1) & (col % 2 == 0), -1.0,
                  jnp.where((row == col - 1) & (col % 2 == 1), 1.0, 0.0)
                  ).astype(f32)

    # Fused projection weight / bias: [q*scale, rot(q)*scale, k, rot(k), v].
    w5 = jnp.concatenate([w_q, w_q @ R, w_k, w_k @ R, w_v], axis=1)   # (D, 5D)
    b5 = jnp.concatenate([b_q, b_q @ R, b_k, b_k @ R, b_v], axis=1)   # (1, 5D)

    # RoPE table (T, D): per-head (T, hd) pattern tiled across heads only.
    pos = jnp.arange(T, dtype=f32)
    ang = pos[:, None] / (10000.0 ** (jnp.arange(0, hd, 2, dtype=f32) / hd))
    rope_hd = jnp.zeros((T, hd), f32)
    rope_hd = rope_hd.at[:, 0::2].set(jnp.cos(ang)).at[:, 1::2].set(jnp.sin(ang))
    rope = jnp.tile(rope_hd, (1, H))                                  # (T, D)

    return {
        "rope": rope,
        "ln1_w": params["ln1_w"].astype(f32), "ln1_b": params["ln1_b"].astype(f32),
        "w5": w5.astype(bf16), "b5": b5.astype(f32),
        "w_proj": params["w_proj"].astype(bf16), "b_proj": params["b_proj"].astype(f32),
        "ln2_w": params["ln2_w"].astype(f32), "ln2_b": params["ln2_b"].astype(f32),
        "w_fc1": params["w_fc1"].astype(bf16), "b_fc1": params["b_fc1"].astype(f32),
        "w_fc2": params["w_fc2"].astype(bf16), "b_fc2": params["b_fc2"].astype(f32),
    }


# ----------------------------------------------------------------------------
# Jitted forward wrapper
# ----------------------------------------------------------------------------
@functools.partial(jax.jit, static_argnames=("num_heads",))
def block_forward(x, prep, num_heads):
    B, T, D = x.shape
    H = num_heads
    hd = D // H
    f32 = jnp.float32

    resident = lambda b: (0, 0)   # weights / tables stay VMEM-resident

    grid_spec = pltpu.PrefetchScalarGridSpec(
        num_scalar_prefetch=0,
        grid=(B,),
        in_specs=[
            pl.BlockSpec((None, T, D), lambda b: (b, 0, 0)),       # x (per batch)
            pl.BlockSpec((T, D), resident),                        # rope
            pl.BlockSpec((1, D), resident),                        # ln1 w
            pl.BlockSpec((1, D), resident),                        # ln1 b
            pl.BlockSpec((D, 5 * D), resident),                    # fused qkv5 w
            pl.BlockSpec((1, 5 * D), resident),                    # fused qkv5 b
            pl.BlockSpec((D, D), resident),                        # proj w
            pl.BlockSpec((1, D), resident),                        # proj b
            pl.BlockSpec((1, D), resident),                        # ln2 w
            pl.BlockSpec((1, D), resident),                        # ln2 b
            pl.BlockSpec((D, 4 * D), resident),                    # fc1 w
            pl.BlockSpec((1, 4 * D), resident),                    # fc1 b
            pl.BlockSpec((4 * D, D), resident),                    # fc2 w
            pl.BlockSpec((1, D), resident),                        # fc2 b
        ],
        out_specs=pl.BlockSpec((None, T, D), lambda b: (b, 0, 0)),
        scratch_shapes=[pltpu.VMEM((T, D), f32)],                  # head-output slab
    )

    kernel = functools.partial(_block_kernel, num_heads=H, head_dim=hd)
    out = pl.pallas_call(
        kernel,
        out_shape=jax.ShapeDtypeStruct((B, T, D), f32),
        grid_spec=grid_spec,
        compiler_params=pltpu.CompilerParams(
            dimension_semantics=("parallel",),        # batch axis -> megacore
            vmem_limit_bytes=32 * 1024 * 1024,        # safe on v5e/v6e/v7x
        ),
    )(x.astype(f32), prep["rope"],
      prep["ln1_w"], prep["ln1_b"],
      prep["w5"], prep["b5"],
      prep["w_proj"], prep["b_proj"],
      prep["ln2_w"], prep["ln2_b"],
      prep["w_fc1"], prep["b_fc1"],
      prep["w_fc2"], prep["b_fc2"])
    return out


# ----------------------------------------------------------------------------
# Pure-JAX reference (mirrors the PyTorch forward) for a sanity check
# ----------------------------------------------------------------------------
def block_reference(x, p, num_heads):
    B, T, D = x.shape
    hd = D // num_heads

    def ln(v, w, b):
        mu = v.mean(-1, keepdims=True)
        var = ((v - mu) ** 2).mean(-1, keepdims=True)
        return (v - mu) / jnp.sqrt(var + 1e-5) * w[0] + b[0]

    h = ln(x, p["ln1_w"], p["ln1_b"])
    qkv = h @ p["w_qkv"] + p["b_qkv"][0]
    qkv = qkv.reshape(B, T, num_heads, 3 * hd).transpose(0, 2, 1, 3)
    q, k, v = qkv[..., :hd], qkv[..., hd:2 * hd], qkv[..., 2 * hd:]

    pos = jnp.arange(T, dtype=jnp.float32)
    ang = pos[:, None] / 10000 ** (jnp.arange(0, hd, 2, dtype=jnp.float32) / hd)
    rope = jnp.zeros((T, hd), jnp.float32)
    rope = rope.at[:, 0::2].set(jnp.cos(ang)).at[:, 1::2].set(jnp.sin(ang))

    def rot(u):
        return jnp.stack([-u[..., 1::2], u[..., 0::2]], axis=-1).reshape(u.shape)

    q = q * rope + rot(q) * (1 - rope)
    k = k * rope + rot(k) * (1 - rope)

    att = jnp.einsum("bhtd,bhsd->bhts", q, k) * (1.0 / math.sqrt(hd))
    mask = jnp.tril(jnp.ones((T, T), bool))
    att = jnp.where(mask, att, -jnp.inf)
    att = jax.nn.softmax(att, axis=-1)
    y = jnp.einsum("bhts,bhsd->bhtd", att, v)
    y = y.transpose(0, 2, 1, 3).reshape(B, T, D)
    x1 = x + (y @ p["w_proj"] + p["b_proj"][0])

    h2 = ln(x1, p["ln2_w"], p["ln2_b"])
    m = h2 @ p["w_fc1"] + p["b_fc1"][0]
    m = 0.5 * m * (1.0 + jax.scipy.special.erf(m / math.sqrt(2.0)))
    return x1 + (m @ p["w_fc2"] + p["b_fc2"][0])


if __name__ == "__main__":
    B, T, D, H = 2, 8, 32, 4  # embed_dim=32, num_heads=4, head_dim=8

    key = jax.random.PRNGKey(0)
    kx, k0, k1, k2, k3 = jax.random.split(key, 5)

    x = jax.random.normal(kx, (B, T, D), jnp.float32)

    params = {
        "ln1_w": jnp.ones((1, D), jnp.float32),
        "ln1_b": jnp.zeros((1, D), jnp.float32),
        "w_qkv": 0.02 * jax.random.normal(k0, (D, 3 * D), jnp.float32),
        "b_qkv": jnp.zeros((1, 3 * D), jnp.float32),
        "w_proj": 0.02 * jax.random.normal(k1, (D, D), jnp.float32),
        "b_proj": jnp.zeros((1, D), jnp.float32),
        "ln2_w": jnp.ones((1, D), jnp.float32),
        "ln2_b": jnp.zeros((1, D), jnp.float32),
        "w_fc1": 0.02 * jax.random.normal(k2, (D, 4 * D), jnp.float32),
        "b_fc1": jnp.zeros((1, 4 * D), jnp.float32),
        "w_fc2": 0.02 * jax.random.normal(k3, (4 * D, D), jnp.float32),
        "b_fc2": jnp.zeros((1, D), jnp.float32),
    }

    prep = prepare_block_params(params, num_heads=H, seq_len=T)   # one-time prep
    out = block_forward(x, prep, num_heads=H)
    out = jax.block_until_ready(out)

    ref = block_reference(x, params, num_heads=H)
    assert out.shape == (B, T, D)
    assert bool(jnp.allclose(out, ref, atol=2e-3, rtol=2e-3)), "mismatch vs reference"

    print("KERNEL_OK")
</pallas_src>

<mosaic_0001>
module attributes {stable_mosaic.version = 11 : i64} {
  func.func @_block_kernel(%arg0: i32, %arg1: memref<1x8x32xf32, #tpu.memory_space<vmem>>, %arg2: memref<8x32xf32, #tpu.memory_space<vmem>>, %arg3: memref<1x32xf32, #tpu.memory_space<vmem>>, %arg4: memref<1x32xf32, #tpu.memory_space<vmem>>, %arg5: memref<32x160xbf16, #tpu.memory_space<vmem>>, %arg6: memref<1x160xf32, #tpu.memory_space<vmem>>, %arg7: memref<32x32xbf16, #tpu.memory_space<vmem>>, %arg8: memref<1x32xf32, #tpu.memory_space<vmem>>, %arg9: memref<1x32xf32, #tpu.memory_space<vmem>>, %arg10: memref<1x32xf32, #tpu.memory_space<vmem>>, %arg11: memref<32x128xbf16, #tpu.memory_space<vmem>>, %arg12: memref<1x128xf32, #tpu.memory_space<vmem>>, %arg13: memref<128x32xbf16, #tpu.memory_space<vmem>>, %arg14: memref<1x32xf32, #tpu.memory_space<vmem>>, %arg15: memref<1x8x32xf32, #tpu.memory_space<vmem>>, %arg16: memref<8x32xf32, #tpu.memory_space<vmem>>) attributes {dimension_semantics = [#tpu.dimension_semantics<parallel>], iteration_bounds = array<i64: 2>, scalar_prefetch = 0 : i64, scratch_operands = 1 : i64, tpu.core_type = #tpu.core_type<tc>, window_params = [{transform_indices = @transform_0, window_bounds = array<i64: 1, 8, 32>}, {pipeline_mode = #tpu.pipeline_mode<synchronous>, transform_indices = @transform_1, window_bounds = array<i64: 8, 32>}, {pipeline_mode = #tpu.pipeline_mode<synchronous>, transform_indices = @transform_2, window_bounds = array<i64: 1, 32>}, {pipeline_mode = #tpu.pipeline_mode<synchronous>, transform_indices = @transform_3, window_bounds = array<i64: 1, 32>}, {pipeline_mode = #tpu.pipeline_mode<synchronous>, transform_indices = @transform_4, window_bounds = array<i64: 32, 160>}, {pipeline_mode = #tpu.pipeline_mode<synchronous>, transform_indices = @transform_5, window_bounds = array<i64: 1, 160>}, {pipeline_mode = #tpu.pipeline_mode<synchronous>, transform_indices = @transform_6, window_bounds = array<i64: 32, 32>}, {pipeline_mode = #tpu.pipeline_mode<synchronous>, transform_indices = @transform_7, window_bounds = array<i64: 1, 32>}, {pipeline_mode = #tpu.pipeline_mode<synchronous>, transform_indices = @transform_8, window_bounds = array<i64: 1, 32>}, {pipeline_mode = #tpu.pipeline_mode<synchronous>, transform_indices = @transform_9, window_bounds = array<i64: 1, 32>}, {pipeline_mode = #tpu.pipeline_mode<synchronous>, transform_indices = @transform_10, window_bounds = array<i64: 32, 128>}, {pipeline_mode = #tpu.pipeline_mode<synchronous>, transform_indices = @transform_11, window_bounds = array<i64: 1, 128>}, {pipeline_mode = #tpu.pipeline_mode<synchronous>, transform_indices = @transform_12, window_bounds = array<i64: 128, 32>}, {pipeline_mode = #tpu.pipeline_mode<synchronous>, transform_indices = @transform_13, window_bounds = array<i64: 1, 32>}, {transform_indices = @transform_14, window_bounds = array<i64: 1, 8, 32>}]} {
    %c0 = arith.constant 0 : index
    %c0_0 = arith.constant 0 : index
    %c0_1 = arith.constant 0 : index
    %0 = vector.load %arg1[%c0, %c0_0, %c0_1] : memref<1x8x32xf32, #tpu.memory_space<vmem>>, vector<1x8x32xf32>
    %1 = vector.shape_cast %0 : vector<1x8x32xf32> to vector<8x32xf32>
    %c0_2 = arith.constant 0 : index
    %c0_3 = arith.constant 0 : index
    %2 = vector.load %arg3[%c0_2, %c0_3] : memref<1x32xf32, #tpu.memory_space<vmem>>, vector<1x32xf32>
    %c0_4 = arith.constant 0 : index
    %c0_5 = arith.constant 0 : index
    %3 = vector.load %arg4[%c0_4, %c0_5] : memref<1x32xf32, #tpu.memory_space<vmem>>, vector<1x32xf32>
    %cst = arith.constant dense<0.000000e+00> : vector<8xf32>
    %4 = vector.multi_reduction <add>, %1, %cst [1] : vector<8x32xf32> to vector<8xf32>
    %5 = vector.shape_cast %4 : vector<8xf32> to vector<8x1xf32>
    %cst_6 = arith.constant 3.200000e+01 : f32
    %6 = vector.broadcast %cst_6 : f32 to vector<8x1xf32>
    %7 = arith.divf %5, %6 : vector<8x1xf32>
    %8 = vector.broadcast %7 : vector<8x1xf32> to vector<8x32xf32>
    %9 = arith.subf %1, %8 : vector<8x32xf32>
    %10 = arith.mulf %9, %9 : vector<8x32xf32>
    %cst_7 = arith.constant dense<0.000000e+00> : vector<8xf32>
    %11 = vector.multi_reduction <add>, %10, %cst_7 [1] : vector<8x32xf32> to vector<8xf32>
    %12 = vector.shape_cast %11 : vector<8xf32> to vector<8x1xf32>
    %cst_8 = arith.constant 3.200000e+01 : f32
    %13 = vector.broadcast %cst_8 : f32 to vector<8x1xf32>
    %14 = arith.divf %12, %13 : vector<8x1xf32>
    %15 = vector.broadcast %7 : vector<8x1xf32> to vector<8x32xf32>
    %16 = arith.subf %1, %15 : vector<8x32xf32>
    %cst_9 = arith.constant 9.99999974E-6 : f32
    %17 = vector.broadcast %cst_9 : f32 to vector<8x1xf32>
    %18 = arith.addf %14, %17 : vector<8x1xf32>
    %19 = math.rsqrt %18 : vector<8x1xf32>
    %20 = vector.broadcast %19 : vector<8x1xf32> to vector<8x32xf32>
    %21 = arith.mulf %16, %20 : vector<8x32xf32>
    %22 = vector.broadcast %2 : vector<1x32xf32> to vector<8x32xf32>
    %23 = arith.mulf %21, %22 : vector<8x32xf32>
    %24 = vector.broadcast %3 : vector<1x32xf32> to vector<8x32xf32>
    %25 = arith.addf %23, %24 : vector<8x32xf32>
    %26 = arith.truncf %25 : vector<8x32xf32> to vector<8x32xbf16>
    %c0_10 = arith.constant 0 : index
    %c0_11 = arith.constant 0 : index
    %27 = vector.load %arg5[%c0_10, %c0_11] : memref<32x160xbf16, #tpu.memory_space<vmem>>, vector<32x160xbf16>
    %cst_12 = arith.constant dense<0.000000e+00> : vector<8x160xf32>
    %28 = tpu.matmul %26, %27, %cst_12 {dimension_numbers = #tpu.dot_dimension_numbers<[1], [0], [0], [1], [0, 0, 1, 1], [], []>} : vector<8x32xbf16>, vector<32x160xbf16>, vector<8x160xf32> -> vector<8x160xf32>
    %c0_13 = arith.constant 0 : index
    %c0_14 = arith.constant 0 : index
    %29 = vector.load %arg6[%c0_13, %c0_14] : memref<1x160xf32, #tpu.memory_space<vmem>>, vector<1x160xf32>
    %30 = vector.broadcast %29 : vector<1x160xf32> to vector<8x160xf32>
    %31 = arith.addf %28, %30 : vector<8x160xf32>
    %32 = vector.extract_strided_slice %31 {offsets = [0, 0], sizes = [8, 32], strides = [1, 1]} : vector<8x160xf32> to vector<8x32xf32>
    %33 = vector.extract_strided_slice %31 {offsets = [0, 32], sizes = [8, 32], strides = [1, 1]} : vector<8x160xf32> to vector<8x32xf32>
    %34 = vector.extract_strided_slice %31 {offsets = [0, 64], sizes = [8, 32], strides = [1, 1]} : vector<8x160xf32> to vector<8x32xf32>
    %35 = vector.extract_strided_slice %31 {offsets = [0, 96], sizes = [8, 32], strides = [1, 1]} : vector<8x160xf32> to vector<8x32xf32>
    %36 = vector.extract_strided_slice %31 {offsets = [0, 128], sizes = [8, 32], strides = [1, 1]} : vector<8x160xf32> to vector<8x32xf32>
    %c0_15 = arith.constant 0 : index
    %c0_16 = arith.constant 0 : index
    %37 = vector.load %arg2[%c0_15, %c0_16] : memref<8x32xf32, #tpu.memory_space<vmem>>, vector<8x32xf32>
    %cst_17 = arith.constant 1.000000e+00 : f32
    %38 = vector.broadcast %cst_17 : f32 to vector<8x32xf32>
    %39 = arith.subf %38, %37 : vector<8x32xf32>
    %40 = arith.mulf %32, %37 : vector<8x32xf32>
    %41 = arith.mulf %33, %39 : vector<8x32xf32>
    %42 = arith.addf %40, %41 : vector<8x32xf32>
    %43 = arith.mulf %34, %37 : vector<8x32xf32>
    %44 = arith.mulf %35, %39 : vector<8x32xf32>
    %45 = arith.addf %43, %44 : vector<8x32xf32>
    %46 = vector.extract_strided_slice %42 {offsets = [0, 0], sizes = [8, 8], strides = [1, 1]} : vector<8x32xf32> to vector<8x8xf32>
    %47 = vector.extract_strided_slice %42 {offsets = [0, 8], sizes = [8, 8], strides = [1, 1]} : vector<8x32xf32> to vector<8x8xf32>
    %48 = vector.extract_strided_slice %42 {offsets = [0, 16], sizes = [8, 8], strides = [1, 1]} : vector<8x32xf32> to vector<8x8xf32>
    %49 = vector.extract_strided_slice %42 {offsets = [0, 24], sizes = [8, 8], strides = [1, 1]} : vector<8x32xf32> to vector<8x8xf32>
    %50 = vector.shape_cast %46 : vector<8x8xf32> to vector<1x8x8xf32>
    %51 = vector.shape_cast %47 : vector<8x8xf32> to vector<1x8x8xf32>
    %52 = vector.shape_cast %48 : vector<8x8xf32> to vector<1x8x8xf32>
    %53 = vector.shape_cast %49 : vector<8x8xf32> to vector<1x8x8xf32>
    %54 = tpu.concatenate %50, %51, %52, %53 in 0 : vector<1x8x8xf32>, vector<1x8x8xf32>, vector<1x8x8xf32>, vector<1x8x8xf32> -> vector<4x8x8xf32>
    %55 = arith.truncf %54 : vector<4x8x8xf32> to vector<4x8x8xbf16>
    %56 = vector.extract_strided_slice %45 {offsets = [0, 0], sizes = [8, 8], strides = [1, 1]} : vector<8x32xf32> to vector<8x8xf32>
    %57 = vector.extract_strided_slice %45 {offsets = [0, 8], sizes = [8, 8], strides = [1, 1]} : vector<8x32xf32> to vector<8x8xf32>
    %58 = vector.extract_strided_slice %45 {offsets = [0, 16], sizes = [8, 8], strides = [1, 1]} : vector<8x32xf32> to vector<8x8xf32>
    %59 = vector.extract_strided_slice %45 {offsets = [0, 24], sizes = [8, 8], strides = [1, 1]} : vector<8x32xf32> to vector<8x8xf32>
    %60 = vector.shape_cast %56 : vector<8x8xf32> to vector<1x8x8xf32>
    %61 = vector.shape_cast %57 : vector<8x8xf32> to vector<1x8x8xf32>
    %62 = vector.shape_cast %58 : vector<8x8xf32> to vector<1x8x8xf32>
    %63 = vector.shape_cast %59 : vector<8x8xf32> to vector<1x8x8xf32>
    %64 = tpu.concatenate %60, %61, %62, %63 in 0 : vector<1x8x8xf32>, vector<1x8x8xf32>, vector<1x8x8xf32>, vector<1x8x8xf32> -> vector<4x8x8xf32>
    %65 = arith.truncf %64 : vector<4x8x8xf32> to vector<4x8x8xbf16>
    %66 = vector.extract_strided_slice %36 {offsets = [0, 0], sizes = [8, 8], strides = [1, 1]} : vector<8x32xf32> to vector<8x8xf32>
    %67 = vector.extract_strided_slice %36 {offsets = [0, 8], sizes = [8, 8], strides = [1, 1]} : vector<8x32xf32> to vector<8x8xf32>
    %68 = vector.extract_strided_slice %36 {offsets = [0, 16], sizes = [8, 8], strides = [1, 1]} : vector<8x32xf32> to vector<8x8xf32>
    %69 = vector.extract_strided_slice %36 {offsets = [0, 24], sizes = [8, 8], strides = [1, 1]} : vector<8x32xf32> to vector<8x8xf32>
    %70 = vector.shape_cast %66 : vector<8x8xf32> to vector<1x8x8xf32>
    %71 = vector.shape_cast %67 : vector<8x8xf32> to vector<1x8x8xf32>
    %72 = vector.shape_cast %68 : vector<8x8xf32> to vector<1x8x8xf32>
    %73 = vector.shape_cast %69 : vector<8x8xf32> to vector<1x8x8xf32>
    %74 = tpu.concatenate %70, %71, %72, %73 in 0 : vector<1x8x8xf32>, vector<1x8x8xf32>, vector<1x8x8xf32>, vector<1x8x8xf32> -> vector<4x8x8xf32>
    %75 = arith.truncf %74 : vector<4x8x8xf32> to vector<4x8x8xbf16>
    %76 = tpu.iota {dimensions = array<i32: 0>} : vector<8x8xi32>
    %77 = tpu.iota {dimensions = array<i32: 1>} : vector<8x8xi32>
    %78 = arith.cmpi sge, %76, %77 : vector<8x8xi32>
    "tpu.trace_start"() <{level = 10 : i32, message = "hqd,hkd->hqk"}> : () -> ()
    %cst_18 = arith.constant dense<0.000000e+00> : vector<4x8x8xf32>
    %79 = tpu.matmul %55, %65, %cst_18 {dimension_numbers = #tpu.dot_dimension_numbers<[2], [2], [1], [1], [0, 0, 0, 1, 1, 1], [0], [0]>} : vector<4x8x8xbf16>, vector<4x8x8xbf16>, vector<4x8x8xf32> -> vector<4x8x8xf32>
    "tpu.trace_stop"() : () -> ()
    %80 = vector.shape_cast %78 : vector<8x8xi1> to vector<1x8x8xi1>
    %cst_19 = arith.constant -1.000000e+30 : f32
    %81 = vector.shape_cast %80 : vector<1x8x8xi1> to vector<1x8x8xi1>
    %82 = vector.broadcast %81 : vector<1x8x8xi1> to vector<4x8x8xi1>
    %83 = vector.broadcast %cst_19 : f32 to vector<4x8x8xf32>
    %84 = arith.select %82, %79, %83 : vector<4x8x8xi1>, vector<4x8x8xf32>
    %cst_20 = arith.constant dense<0xFF800000> : vector<4x8xf32>
    %85 = vector.multi_reduction <maximumf>, %84, %cst_20 [2] : vector<4x8x8xf32> to vector<4x8xf32>
    %86 = vector.shape_cast %85 : vector<4x8xf32> to vector<4x8x1xf32>
    %87 = vector.broadcast %86 : vector<4x8x1xf32> to vector<4x8x8xf32>
    %88 = arith.subf %84, %87 : vector<4x8x8xf32>
    %89 = math.exp %88 : vector<4x8x8xf32>
    %cst_21 = arith.constant dense<0.000000e+00> : vector<4x8xf32>
    %90 = vector.multi_reduction <add>, %89, %cst_21 [2] : vector<4x8x8xf32> to vector<4x8xf32>
    %91 = vector.shape_cast %90 : vector<4x8xf32> to vector<4x8x1xf32>
    %92 = tpu.reciprocal %91 {approx = true} : vector<4x8x1xf32> -> vector<4x8x1xf32>
    %93 = vector.broadcast %92 : vector<4x8x1xf32> to vector<4x8x8xf32>
    %94 = arith.mulf %89, %93 : vector<4x8x8xf32>
    %95 = arith.truncf %94 : vector<4x8x8xf32> to vector<4x8x8xbf16>
    "tpu.trace_start"() <{level = 10 : i32, message = "hqk,hkd->hqd"}> : () -> ()
    %cst_22 = arith.constant dense<0.000000e+00> : vector<4x8x8xf32>
    %96 = tpu.matmul %95, %75, %cst_22 {dimension_numbers = #tpu.dot_dimension_numbers<[2], [1], [1], [2], [0, 0, 0, 1, 1, 2], [0], [0]>} : vector<4x8x8xbf16>, vector<4x8x8xbf16>, vector<4x8x8xf32> -> vector<4x8x8xf32>
    "tpu.trace_stop"() : () -> ()
    %97 = vector.extract_strided_slice %96 {offsets = [0, 0, 0], sizes = [1, 8, 8], strides = [1, 1, 1]} : vector<4x8x8xf32> to vector<1x8x8xf32>
    %98 = vector.shape_cast %97 : vector<1x8x8xf32> to vector<8x8xf32>
    %c0_23 = arith.constant 0 : index
    %c0_24 = arith.constant 0 : index
    %99 = vector.load %arg16[%c0_23, %c0_24] : memref<8x32xf32, #tpu.memory_space<vmem>>, vector<8x8xf32>
    tpu.vector_store %arg16[%c0_23, %c0_24], %98 {strides = array<i32>} : memref<8x32xf32, #tpu.memory_space<vmem>>, vector<8x8xf32>,
    %100 = vector.extract_strided_slice %96 {offsets = [1, 0, 0], sizes = [1, 8, 8], strides = [1, 1, 1]} : vector<4x8x8xf32> to vector<1x8x8xf32>
    %101 = vector.shape_cast %100 : vector<1x8x8xf32> to vector<8x8xf32>
    %c0_25 = arith.constant 0 : index
    %c8 = arith.constant 8 : index
    %102 = vector.load %arg16[%c0_25, %c8] : memref<8x32xf32, #tpu.memory_space<vmem>>, vector<8x8xf32>
    tpu.vector_store %arg16[%c0_25, %c8], %101 {strides = array<i32>} : memref<8x32xf32, #tpu.memory_space<vmem>>, vector<8x8xf32>,
    %103 = vector.extract_strided_slice %96 {offsets = [2, 0, 0], sizes = [1, 8, 8], strides = [1, 1, 1]} : vector<4x8x8xf32> to vector<1x8x8xf32>
    %104 = vector.shape_cast %103 : vector<1x8x8xf32> to vector<8x8xf32>
    %c0_26 = arith.constant 0 : index
    %c16 = arith.constant 16 : index
    %105 = vector.load %arg16[%c0_26, %c16] : memref<8x32xf32, #tpu.memory_space<vmem>>, vector<8x8xf32>
    tpu.vector_store %arg16[%c0_26, %c16], %104 {strides = array<i32>} : memref<8x32xf32, #tpu.memory_space<vmem>>, vector<8x8xf32>,
    %106 = vector.extract_strided_slice %96 {offsets = [3, 0, 0], sizes = [1, 8, 8], strides = [1, 1, 1]} : vector<4x8x8xf32> to vector<1x8x8xf32>
    %107 = vector.shape_cast %106 : vector<1x8x8xf32> to vector<8x8xf32>
    %c0_27 = arith.constant 0 : index
    %c24 = arith.constant 24 : index
    %108 = vector.load %arg16[%c0_27, %c24] : memref<8x32xf32, #tpu.memory_space<vmem>>, vector<8x8xf32>
    tpu.vector_store %arg16[%c0_27, %c24], %107 {strides = array<i32>} : memref<8x32xf32, #tpu.memory_space<vmem>>, vector<8x8xf32>,
    %c0_28 = arith.constant 0 : index
    %c0_29 = arith.constant 0 : index
    %109 = vector.load %arg16[%c0_28, %c0_29] : memref<8x32xf32, #tpu.memory_space<vmem>>, vector<8x32xf32>
    %110 = arith.truncf %109 : vector<8x32xf32> to vector<8x32xbf16>
    %c0_30 = arith.constant 0 : index
    %c0_31 = arith.constant 0 : index
    %111 = vector.load %arg7[%c0_30, %c0_31] : memref<32x32xbf16, #tpu.memory_space<vmem>>, vector<32x32xbf16>
    %cst_32 = arith.constant dense<0.000000e+00> : vector<8x32xf32>
    %112 = tpu.matmul %110, %111, %cst_32 {dimension_numbers = #tpu.dot_dimension_numbers<[1], [0], [0], [1], [0, 0, 1, 1], [], []>} : vector<8x32xbf16>, vector<32x32xbf16>, vector<8x32xf32> -> vector<8x32xf32>
    %c0_33 = arith.constant 0 : index
    %c0_34 = arith.constant 0 : index
    %113 = vector.load %arg8[%c0_33, %c0_34] : memref<1x32xf32, #tpu.memory_space<vmem>>, vector<1x32xf32>
    %114 = vector.broadcast %113 : vector<1x32xf32> to vector<8x32xf32>
    %115 = arith.addf %112, %114 : vector<8x32xf32>
    %116 = arith.addf %1, %115 : vector<8x32xf32>
    %c0_35 = arith.constant 0 : index
    %c0_36 = arith.constant 0 : index
    %117 = vector.load %arg9[%c0_35, %c0_36] : memref<1x32xf32, #tpu.memory_space<vmem>>, vector<1x32xf32>
    %c0_37 = arith.constant 0 : index
    %c0_38 = arith.constant 0 : index
    %118 = vector.load %arg10[%c0_37, %c0_38] : memref<1x32xf32, #tpu.memory_space<vmem>>, vector<1x32xf32>
    %cst_39 = arith.constant dense<0.000000e+00> : vector<8xf32>
    %119 = vector.multi_reduction <add>, %116, %cst_39 [1] : vector<8x32xf32> to vector<8xf32>
    %120 = vector.shape_cast %119 : vector<8xf32> to vector<8x1xf32>
    %cst_40 = arith.constant 3.200000e+01 : f32
    %121 = vector.broadcast %cst_40 : f32 to vector<8x1xf32>
    %122 = arith.divf %120, %121 : vector<8x1xf32>
    %123 = vector.broadcast %122 : vector<8x1xf32> to vector<8x32xf32>
    %124 = arith.subf %116, %123 : vector<8x32xf32>
    %125 = arith.mulf %124, %124 : vector<8x32xf32>
    %cst_41 = arith.constant dense<0.000000e+00> : vector<8xf32>
    %126 = vector.multi_reduction <add>, %125, %cst_41 [1] : vector<8x32xf32> to vector<8xf32>
    %127 = vector.shape_cast %126 : vector<8xf32> to vector<8x1xf32>
    %cst_42 = arith.constant 3.200000e+01 : f32
    %128 = vector.broadcast %cst_42 : f32 to vector<8x1xf32>
    %129 = arith.divf %127, %128 : vector<8x1xf32>
    %130 = vector.broadcast %122 : vector<8x1xf32> to vector<8x32xf32>
    %131 = arith.subf %116, %130 : vector<8x32xf32>
    %cst_43 = arith.constant 9.99999974E-6 : f32
    %132 = vector.broadcast %cst_43 : f32 to vector<8x1xf32>
    %133 = arith.addf %129, %132 : vector<8x1xf32>
    %134 = math.rsqrt %133 : vector<8x1xf32>
    %135 = vector.broadcast %134 : vector<8x1xf32> to vector<8x32xf32>
    %136 = arith.mulf %131, %135 : vector<8x32xf32>
    %137 = vector.broadcast %117 : vector<1x32xf32> to vector<8x32xf32>
    %138 = arith.mulf %136, %137 : vector<8x32xf32>
    %139 = vector.broadcast %118 : vector<1x32xf32> to vector<8x32xf32>
    %140 = arith.addf %138, %139 : vector<8x32xf32>
    %141 = arith.truncf %140 : vector<8x32xf32> to vector<8x32xbf16>
    %c0_44 = arith.constant 0 : index
    %c0_45 = arith.constant 0 : index
    %142 = vector.load %arg11[%c0_44, %c0_45] : memref<32x128xbf16, #tpu.memory_space<vmem>>, vector<32x128xbf16>
    %cst_46 = arith.constant dense<0.000000e+00> : vector<8x128xf32>
    %143 = tpu.matmul %141, %142, %cst_46 {dimension_numbers = #tpu.dot_dimension_numbers<[1], [0], [0], [1], [0, 0, 1, 1], [], []>} : vector<8x32xbf16>, vector<32x128xbf16>, vector<8x128xf32> -> vector<8x128xf32>
    %c0_47 = arith.constant 0 : index
    %c0_48 = arith.constant 0 : index
    %144 = vector.load %arg12[%c0_47, %c0_48] : memref<1x128xf32, #tpu.memory_space<vmem>>, vector<1x128xf32>
    %145 = vector.broadcast %144 : vector<1x128xf32> to vector<8x128xf32>
    %146 = arith.addf %143, %145 : vector<8x128xf32>
    %cst_49 = arith.constant 5.000000e-01 : f32
    %147 = vector.broadcast %cst_49 : f32 to vector<8x128xf32>
    %148 = arith.mulf %147, %146 : vector<8x128xf32>
    %cst_50 = arith.constant 0.707106769 : f32
    %149 = vector.broadcast %cst_50 : f32 to vector<8x128xf32>
    %150 = arith.mulf %146, %149 : vector<8x128xf32>
    %151 = math.absf %150 : vector<8x128xf32>
    %cst_51 = arith.constant 0.327591091 : f32
    %152 = vector.broadcast %cst_51 : f32 to vector<8x128xf32>
    %153 = arith.mulf %152, %151 : vector<8x128xf32>
    %cst_52 = arith.constant 1.000000e+00 : f32
    %154 = vector.broadcast %cst_52 : f32 to vector<8x128xf32>
    %155 = arith.addf %154, %153 : vector<8x128xf32>
    %cst_53 = arith.constant 1.000000e+00 : f32
    %156 = vector.broadcast %cst_53 : f32 to vector<8x128xf32>
    %157 = arith.divf %156, %155 : vector<8x128xf32>
    %cst_54 = arith.constant 1.06140542 : f32
    %158 = vector.broadcast %cst_54 : f32 to vector<8x128xf32>
    %159 = arith.mulf %158, %157 : vector<8x128xf32>
    %cst_55 = arith.constant -1.45315206 : f32
    %160 = vector.broadcast %cst_55 : f32 to vector<8x128xf32>
    %161 = arith.addf %159, %160 : vector<8x128xf32>
    %162 = arith.mulf %161, %157 : vector<8x128xf32>
    %cst_56 = arith.constant 1.42141378 : f32
    %163 = vector.broadcast %cst_56 : f32 to vector<8x128xf32>
    %164 = arith.addf %162, %163 : vector<8x128xf32>
    %165 = arith.mulf %164, %157 : vector<8x128xf32>
    %cst_57 = arith.constant -0.284496725 : f32
    %166 = vector.broadcast %cst_57 : f32 to vector<8x128xf32>
    %167 = arith.addf %165, %166 : vector<8x128xf32>
    %168 = arith.mulf %167, %157 : vector<8x128xf32>
    %cst_58 = arith.constant 0.254829586 : f32
    %169 = vector.broadcast %cst_58 : f32 to vector<8x128xf32>
    %170 = arith.addf %168, %169 : vector<8x128xf32>
    %171 = arith.mulf %170, %157 : vector<8x128xf32>
    %cst_59 = arith.constant 0.000000e+00 : f32
    %172 = vector.broadcast %cst_59 : f32 to vector<8x128xf32>
    %173 = arith.subf %172, %151 : vector<8x128xf32>
    %174 = arith.mulf %173, %151 : vector<8x128xf32>
    %175 = math.exp %174 : vector<8x128xf32>
    %176 = arith.mulf %171, %175 : vector<8x128xf32>
    %cst_60 = arith.constant 1.000000e+00 : f32
    %177 = vector.broadcast %cst_60 : f32 to vector<8x128xf32>
    %178 = arith.subf %177, %176 : vector<8x128xf32>
    %cst_61 = arith.constant 0.000000e+00 : f32
    %179 = vector.broadcast %cst_61 : f32 to vector<8x128xf32>
    %180 = arith.cmpf oge, %150, %179 : vector<8x128xf32>
    %cst_62 = arith.constant 0.000000e+00 : f32
    %181 = vector.broadcast %cst_62 : f32 to vector<8x128xf32>
    %182 = arith.subf %181, %178 : vector<8x128xf32>
    %183 = arith.select %180, %178, %182 : vector<8x128xi1>, vector<8x128xf32>
    %cst_63 = arith.constant 1.000000e+00 : f32
    %184 = vector.broadcast %cst_63 : f32 to vector<8x128xf32>
    %185 = arith.addf %184, %183 : vector<8x128xf32>
    %186 = arith.mulf %148, %185 : vector<8x128xf32>
    %187 = arith.truncf %186 : vector<8x128xf32> to vector<8x128xbf16>
    %c0_64 = arith.constant 0 : index
    %c0_65 = arith.constant 0 : index
    %188 = vector.load %arg13[%c0_64, %c0_65] : memref<128x32xbf16, #tpu.memory_space<vmem>>, vector<128x32xbf16>
    %cst_66 = arith.constant dense<0.000000e+00> : vector<8x32xf32>
    %189 = tpu.matmul %187, %188, %cst_66 {dimension_numbers = #tpu.dot_dimension_numbers<[1], [0], [0], [1], [0, 0, 1, 1], [], []>} : vector<8x128xbf16>, vector<128x32xbf16>, vector<8x32xf32> -> vector<8x32xf32>
    %c0_67 = arith.constant 0 : index
    %c0_68 = arith.constant 0 : index
    %190 = vector.load %arg14[%c0_67, %c0_68] : memref<1x32xf32, #tpu.memory_space<vmem>>, vector<1x32xf32>
    %191 = vector.broadcast %190 : vector<1x32xf32> to vector<8x32xf32>
    %192 = arith.addf %189, %191 : vector<8x32xf32>
    %193 = arith.addf %116, %192 : vector<8x32xf32>
    %c0_69 = arith.constant 0 : index
    %c0_70 = arith.constant 0 : index
    %c0_71 = arith.constant 0 : index
    %194 = vector.load %arg15[%c0_69, %c0_70, %c0_71] : memref<1x8x32xf32, #tpu.memory_space<vmem>>, vector<1x8x32xf32>
    %195 = vector.shape_cast %194 : vector<1x8x32xf32> to vector<8x32xf32>
    %196 = vector.shape_cast %193 : vector<8x32xf32> to vector<1x8x32xf32>
    tpu.vector_store %arg15[%c0_69, %c0_70, %c0_71], %196 {strides = array<i32>} : memref<1x8x32xf32, #tpu.memory_space<vmem>>, vector<1x8x32xf32>,
    return
  }
  func.func @transform_0(%arg0: i32) -> (i32, i32, i32) {
    %c0_i32 = arith.constant 0 : i32
    %c0_i32_0 = arith.constant 0 : i32
    %c0_i32_1 = arith.constant 0 : i32
    return %arg0, %c0_i32, %c0_i32_0 : i32, i32, i32
  }
  func.func @transform_1(%arg0: i32) -> (i32, i32) {
    %c0_i32 = arith.constant 0 : i32
    %c0_i32_0 = arith.constant 0 : i32
    %c0_i32_1 = arith.constant 0 : i32
    return %c0_i32, %c0_i32_0 : i32, i32
  }
  func.func @transform_2(%arg0: i32) -> (i32, i32) {
    %c0_i32 = arith.constant 0 : i32
    %c0_i32_0 = arith.constant 0 : i32
    %c0_i32_1 = arith.constant 0 : i32
    return %c0_i32, %c0_i32_0 : i32, i32
  }
  func.func @transform_3(%arg0: i32) -> (i32, i32) {
    %c0_i32 = arith.constant 0 : i32
    %c0_i32_0 = arith.constant 0 : i32
    %c0_i32_1 = arith.constant 0 : i32
    return %c0_i32, %c0_i32_0 : i32, i32
  }
  func.func @transform_4(%arg0: i32) -> (i32, i32) {
    %c0_i32 = arith.constant 0 : i32
    %c0_i32_0 = arith.constant 0 : i32
    %c0_i32_1 = arith.constant 0 : i32
    return %c0_i32, %c0_i32_0 : i32, i32
  }
  func.func @transform_5(%arg0: i32) -> (i32, i32) {
    %c0_i32 = arith.constant 0 : i32
    %c0_i32_0 = arith.constant 0 : i32
    %c0_i32_1 = arith.constant 0 : i32
    return %c0_i32, %c0_i32_0 : i32, i32
  }
  func.func @transform_6(%arg0: i32) -> (i32, i32) {
    %c0_i32 = arith.constant 0 : i32
    %c0_i32_0 = arith.constant 0 : i32
    %c0_i32_1 = arith.constant 0 : i32
    return %c0_i32, %c0_i32_0 : i32, i32
  }
  func.func @transform_7(%arg0: i32) -> (i32, i32) {
    %c0_i32 = arith.constant 0 : i32
    %c0_i32_0 = arith.constant 0 : i32
    %c0_i32_1 = arith.constant 0 : i32
    return %c0_i32, %c0_i32_0 : i32, i32
  }
  func.func @transform_8(%arg0: i32) -> (i32, i32) {
    %c0_i32 = arith.constant 0 : i32
    %c0_i32_0 = arith.constant 0 : i32
    %c0_i32_1 = arith.constant 0 : i32
    return %c0_i32, %c0_i32_0 : i32, i32
  }
  func.func @transform_9(%arg0: i32) -> (i32, i32) {
    %c0_i32 = arith.constant 0 : i32
    %c0_i32_0 = arith.constant 0 : i32
    %c0_i32_1 = arith.constant 0 : i32
    return %c0_i32, %c0_i32_0 : i32, i32
  }
  func.func @transform_10(%arg0: i32) -> (i32, i32) {
    %c0_i32 = arith.constant 0 : i32
    %c0_i32_0 = arith.constant 0 : i32
    %c0_i32_1 = arith.constant 0 : i32
    return %c0_i32, %c0_i32_0 : i32, i32
  }
  func.func @transform_11(%arg0: i32) -> (i32, i32) {
    %c0_i32 = arith.constant 0 : i32
    %c0_i32_0 = arith.constant 0 : i32
    %c0_i32_1 = arith.constant 0 : i32
    return %c0_i32, %c0_i32_0 : i32, i32
  }
  func.func @transform_12(%arg0: i32) -> (i32, i32) {
    %c0_i32 = arith.constant 0 : i32
    %c0_i32_0 = arith.constant 0 : i32
    %c0_i32_1 = arith.constant 0 : i32
    return %c0_i32, %c0_i32_0 : i32, i32
  }
  func.func @transform_13(%arg0: i32) -> (i32, i32) {
    %c0_i32 = arith.constant 0 : i32
    %c0_i32_0 = arith.constant 0 : i32
    %c0_i32_1 = arith.constant 0 : i32
    return %c0_i32, %c0_i32_0 : i32, i32
  }
  func.func @transform_14(%arg0: i32) -> (i32, i32, i32) {
    %c0_i32 = arith.constant 0 : i32
    %c0_i32_0 = arith.constant 0 : i32
    %c0_i32_1 = arith.constant 0 : i32
    return %arg0, %c0_i32, %c0_i32_0 : i32, i32, i32
  }
}

</mosaic_0001>

<llo_original>
// kernel: block_forward.1
$region0: #{block_forward.1}
  #allocation0 [shape = 'u32[]', space=smem, size = 0x4, offset = 0x4, fixed_abs, tag = 'smem constant byte address 0x4 - core index']
  #allocation1 [shape = 'u32[144,128]{1,0:T(1,128)}', space=vmem, size = 0x12000, scoped, tag = 'internal scratch']
  #allocation2 [shape = 'f32[8,32]{1,0:T(8,128)}', space=vmem, size = 0x1000, scoped, tag = 'scratch operand']
  %s0 = inlined_call_operand.vmem [shape: f32[2,8,32], index: 0, kind: input, shape index: {}]
  %s1 = inlined_call_operand.hbm [shape: f32[8,32], index: 1, kind: input, shape index: {}]
  %s2 = inlined_call_operand.vmem [shape: f32[1,32], index: 2, kind: input, shape index: {}]
  %s3 = inlined_call_operand.vmem [shape: f32[1,32], index: 3, kind: input, shape index: {}]
  %s4 = inlined_call_operand.vmem [shape: bf16[32,160], index: 4, kind: input, shape index: {}]
  %s5 = inlined_call_operand.hbm [shape: f32[1,160], index: 5, kind: input, shape index: {}]
  %s6 = inlined_call_operand.vmem [shape: bf16[32,32], index: 6, kind: input, shape index: {}]
  %s7 = inlined_call_operand.vmem [shape: f32[1,32], index: 7, kind: input, shape index: {}]
  %s8 = inlined_call_operand.vmem [shape: f32[1,32], index: 8, kind: input, shape index: {}]
  %s9 = inlined_call_operand.vmem [shape: f32[1,32], index: 9, kind: input, shape index: {}]
  %s10 = inlined_call_operand.vmem [shape: bf16[32,128], index: 10, kind: input, shape index: {}]
  %s11 = inlined_call_operand.hbm [shape: f32[1,128], index: 11, kind: input, shape index: {}]
  %s12 = inlined_call_operand.vmem [shape: bf16[128,32], index: 12, kind: input, shape index: {}]
  %s13 = inlined_call_operand.hbm [shape: f32[1,32], index: 13, kind: input, shape index: {}]
  %s14 = inlined_call_operand.hbm [shape: f32[2,8,32], index: 14, kind: output, shape index: {}]
  %s15 = sld [smem:[#allocation0]]
  $region105: #{block_forward.1} parent=0
    _
  %s17 = ssub.s32 1, %s15
  %s18 = scalar_select 0, %s17, %s15
  $region1: #{block_forward.1} parent=0
    #allocation3 [shape = 'u8[4096]{0}', space=vmem, size = 0x1000, scoped, tag = 'input window, operand 1, single buffered']
    #allocation4 [shape = 's32[2]{0}', space=sflag, size = 0x8, scoped, tag = 'scoped memory for block_forward.1']
    #allocation5 [shape = 's32[2]{0}', space=sflag, size = 0x8, scoped, tag = 'scoped memory for block_forward.1']
    #allocation6 [shape = 'u8[1024]{0}', space=vmem, size = 0x400, scoped, tag = 'input window, operand 5, single buffered']
    #allocation7 [shape = 's32[1]{0}', space=sflag, size = 0x4, scoped, tag = 'scoped memory for block_forward.1']
    #allocation8 [shape = 'u8[512]{0}', space=vmem, size = 0x400, scoped, tag = 'input window, operand 11, single buffered']
    #allocation9 [shape = 'u8[512]{0}', space=vmem, size = 0x400, scoped, tag = 'input window, operand 13, single buffered']
    #allocation10 [shape = 's32[1]{0}', space=sflag, size = 0x4, scoped, tag = 'scoped memory for block_forward.1']
    #allocation11 [shape = 'u8[8192]{0}', space=vmem, size = 0x2000, scoped, tag = 'output window, operand 0']
    %19 = vsyncpa [#allocation4], 0
    %20 = vsyncpa [#allocation7], 0
    %21 = vsyncpa [#allocation10], 0
    %22 = vsyncpa [#allocation5], 0
    %s23 = scalar_lea.sflag [#allocation5], 1
    %24 = vsyncpa %s23, 0
    loop: start=0, step=1, limit=4
    $region2: #{block_forward.1} parent=1 // loop_pre_header
      _
    $region3: #{block_forward.1} parent=1 // loop_header
      %s26 = sphi 0, %s30
      %p27 = scmp.ge.s32.totalorder %s26, 4
      %s36 = sphi 0, %s38
      %s39 = sphi 0, %s36
      %s40 = sphi 0, %s39
      %s56 = sphi 0, %s40
      %s60 = sphi 0, %s60
      %s62 = sphi 0, %s60
      %s63 = sphi 0, %s62
      %s77 = sphi 0, %s63
      %s81 = sphi 0, %s81
      %s83 = sphi 0, %s81
      %s84 = sphi 0, %s83
      %s98 = sphi 0, %s84
      %s102 = sphi 0, %s102
      %s104 = sphi 0, %s102
      %s105 = sphi 0, %s104
      %s119 = sphi 0, %s105
      %s123 = sphi 0, %s123
      %s125 = sphi 0, %s123
      %s126 = sphi 0, %s125
      %s140 = sphi 0, %s126
      %s144 = sphi 0, %s144
      %s146 = sphi 0, %s144
      %s147 = sphi 0, %s146
      %s161 = sphi 0, %s147
      %s165 = sphi 0, %s165
      %s167 = sphi 0, %s165
      %s168 = sphi 0, %s167
      %s182 = sphi 0, %s168
      %s186 = sphi 0, %s186
      %s188 = sphi 0, %s186
      %s189 = sphi 0, %s188
      %s203 = sphi 0, %s189
      %s207 = sphi 0, %s207
      %s209 = sphi 0, %s207
      %s210 = sphi 0, %s209
      %s224 = sphi 0, %s210
      %s228 = sphi 0, %s228
      %s230 = sphi 0, %s228
      %s231 = sphi 0, %s230
      %s245 = sphi 0, %s231
      %s249 = sphi 0, %s249
      %s251 = sphi 0, %s249
      %s252 = sphi 0, %s251
      %s266 = sphi 0, %s252
      %s270 = sphi 0, %s270
      %s272 = sphi 0, %s270
      %s273 = sphi 0, %s272
      %s287 = sphi 0, %s273
      %s291 = sphi 0, %s291
      %s293 = sphi 0, %s291
      %s294 = sphi 0, %s293
      %s308 = sphi 0, %s294
      %s312 = sphi 0, %s312
      %s314 = sphi 0, %s312
      %s315 = sphi 0, %s314
      %s329 = sphi 0, %s315
      %s335 = sphi 0, %s337
      %s338 = sphi 0, %s335
      %s339 = sphi 0, %s338
      %s355 = sphi 0, %s339
    $region4: #{block_forward.1} parent=1 // loop_header_branch
      %29 = sbr.rel (%p27) target = $region8
    $region5: #{block_forward.1} parent=1 // loop_body
      %s31 = ssub.s32 %s26, 1
      %s32 = ssub.s32 %s26, 2
      %s33 = sadd.s32 %s26, 1
      %s34 = ssub.s32 %s26, %s33
      %p35 = scmp.eq.s32.totalorder %s34, 0
      %s37 = sadd.s32 %s36, 1
      %s38 = scalar_select %p35, %s36, %s37
      %p41 = pneg %p35
      %p42 = scmp.eq.s32.totalorder %s26, 1
      %p43 = por %p41, %p42
      %p44 = scmp.ne.s32.totalorder %s36, %s39
      %p45 = scmp.eq.s32.totalorder %s26, 0
      %p46 = por %p44, %p45
      %p47 = scmp.ne.s32.totalorder %s36, %s39
      %p48 = scmp.eq.s32.totalorder %s31, 1
      %p49 = por %p47, %p48
      %p50 = scmp.ne.s32.totalorder %s39, %s40
      %p51 = scmp.eq.s32.totalorder %s31, 0
      %p52 = por %p50, %p51
      %p53 = scmp.ne.s32.totalorder %s39, %s40
      %p54 = scmp.eq.s32.totalorder %s32, 1
      %p55 = por %p53, %p54
      %p57 = scmp.ne.s32.totalorder %s40, %s56
      %p58 = scmp.eq.s32.totalorder %s32, 0
      %p59 = por %p57, %p58
      %s61 = sadd.s32 %s60, 1
      %p64 = scmp.eq.s32.totalorder %s26, 1
      %p65 = scmp.ne.s32.totalorder %s60, %s62
      %p66 = scmp.eq.s32.totalorder %s26, 0
      %p67 = por %p65, %p66
      %p68 = scmp.ne.s32.totalorder %s60, %s62
      %p69 = scmp.eq.s32.totalorder %s31, 1
      %p70 = por %p68, %p69
      %p71 = scmp.ne.s32.totalorder %s62, %s63
      %p72 = scmp.eq.s32.totalorder %s31, 0
      %p73 = por %p71, %p72
      %p74 = scmp.ne.s32.totalorder %s62, %s63
      %p75 = scmp.eq.s32.totalorder %s32, 1
      %p76 = por %p74, %p75
      %p78 = scmp.ne.s32.totalorder %s63, %s77
      %p79 = scmp.eq.s32.totalorder %s32, 0
      %p80 = por %p78, %p79
      %s82 = sadd.s32 %s81, 1
      %p85 = scmp.eq.s32.totalorder %s26, 1
      %p86 = scmp.ne.s32.totalorder %s81, %s83
      %p87 = scmp.eq.s32.totalorder %s26, 0
      %p88 = por %p86, %p87
      %p89 = scmp.ne.s32.totalorder %s81, %s83
      %p90 = scmp.eq.s32.totalorder %s31, 1
      %p91 = por %p89, %p90
      %p92 = scmp.ne.s32.totalorder %s83, %s84
      %p93 = scmp.eq.s32.totalorder %s31, 0
      %p94 = por %p92, %p93
      %p95 = scmp.ne.s32.totalorder %s83, %s84
      %p96 = scmp.eq.s32.totalorder %s32, 1
      %p97 = por %p95, %p96
      %p99 = scmp.ne.s32.totalorder %s84, %s98
      %p100 = scmp.eq.s32.totalorder %s32, 0
      %p101 = por %p99, %p100
      %s103 = sadd.s32 %s102, 1
      %p106 = scmp.eq.s32.totalorder %s26, 1
      %p107 = scmp.ne.s32.totalorder %s102, %s104
      %p108 = scmp.eq.s32.totalorder %s26, 0
      %p109 = por %p107, %p108
      %p110 = scmp.ne.s32.totalorder %s102, %s104
      %p111 = scmp.eq.s32.totalorder %s31, 1
      %p112 = por %p110, %p111
      %p113 = scmp.ne.s32.totalorder %s104, %s105
      %p114 = scmp.eq.s32.totalorder %s31, 0
      %p115 = por %p113, %p114
      %p116 = scmp.ne.s32.totalorder %s104, %s105
      %p117 = scmp.eq.s32.totalorder %s32, 1
      %p118 = por %p116, %p117
      %p120 = scmp.ne.s32.totalorder %s105, %s119
      %p121 = scmp.eq.s32.totalorder %s32, 0
      %p122 = por %p120, %p121
      %s124 = sadd.s32 %s123, 1
      %p127 = scmp.eq.s32.totalorder %s26, 1
      %p128 = scmp.ne.s32.totalorder %s123, %s125
      %p129 = scmp.eq.s32.totalorder %s26, 0
      %p130 = por %p128, %p129
      %p131 = scmp.ne.s32.totalorder %s123, %s125
      %p132 = scmp.eq.s32.totalorder %s31, 1
      %p133 = por %p131, %p132
      %p134 = scmp.ne.s32.totalorder %s125, %s126
      %p135 = scmp.eq.s32.totalorder %s31, 0
      %p136 = por %p134, %p135
      %p137 = scmp.ne.s32.totalorder %s125, %s126
      %p138 = scmp.eq.s32.totalorder %s32, 1
      %p139 = por %p137, %p138
      %p141 = scmp.ne.s32.totalorder %s126, %s140
      %p142 = scmp.eq.s32.totalorder %s32, 0
      %p143 = por %p141, %p142
      %s145 = sadd.s32 %s144, 1
      %p148 = scmp.eq.s32.totalorder %s26, 1
      %p149 = scmp.ne.s32.totalorder %s144, %s146
      %p150 = scmp.eq.s32.totalorder %s26, 0
      %p151 = por %p149, %p150
      %p152 = scmp.ne.s32.totalorder %s144, %s146
      %p153 = scmp.eq.s32.totalorder %s31, 1
      %p154 = por %p152, %p153
      %p155 = scmp.ne.s32.totalorder %s146, %s147
      %p156 = scmp.eq.s32.totalorder %s31, 0
      %p157 = por %p155, %p156
      %p158 = scmp.ne.s32.totalorder %s146, %s147
      %p159 = scmp.eq.s32.totalorder %s32, 1
      %p160 = por %p158, %p159
      %p162 = scmp.ne.s32.totalorder %s147, %s161
      %p163 = scmp.eq.s32.totalorder %s32, 0
      %p164 = por %p162, %p163
      %s166 = sadd.s32 %s165, 1
      %p169 = scmp.eq.s32.totalorder %s26, 1
      %p170 = scmp.ne.s32.totalorder %s165, %s167
      %p171 = scmp.eq.s32.totalorder %s26, 0
      %p172 = por %p170, %p171
      %p173 = scmp.ne.s32.totalorder %s165, %s167
      %p174 = scmp.eq.s32.totalorder %s31, 1
      %p175 = por %p173, %p174
      %p176 = scmp.ne.s32.totalorder %s167, %s168
      %p177 = scmp.eq.s32.totalorder %s31, 0
      %p178 = por %p176, %p177
      %p179 = scmp.ne.s32.totalorder %s167, %s168
      %p180 = scmp.eq.s32.totalorder %s32, 1
      %p181 = por %p179, %p180
      %p183 = scmp.ne.s32.totalorder %s168, %s182
      %p184 = scmp.eq.s32.totalorder %s32, 0
      %p185 = por %p183, %p184
      %s187 = sadd.s32 %s186, 1
      %p190 = scmp.eq.s32.totalorder %s26, 1
      %p191 = scmp.ne.s32.totalorder %s186, %s188
      %p192 = scmp.eq.s32.totalorder %s26, 0
      %p193 = por %p191, %p192
      %p194 = scmp.ne.s32.totalorder %s186, %s188
      %p195 = scmp.eq.s32.totalorder %s31, 1
      %p196 = por %p194, %p195
      %p197 = scmp.ne.s32.totalorder %s188, %s189
      %p198 = scmp.eq.s32.totalorder %s31, 0
      %p199 = por %p197, %p198
      %p200 = scmp.ne.s32.totalorder %s188, %s189
      %p201 = scmp.eq.s32.totalorder %s32, 1
      %p202 = por %p200, %p201
      %p204 = scmp.ne.s32.totalorder %s189, %s203
      %p205 = scmp.eq.s32.totalorder %s32, 0
      %p206 = por %p204, %p205
      %s208 = sadd.s32 %s207, 1
      %p211 = scmp.eq.s32.totalorder %s26, 1
      %p212 = scmp.ne.s32.totalorder %s207, %s209
      %p213 = scmp.eq.s32.totalorder %s26, 0
      %p214 = por %p212, %p213
      %p215 = scmp.ne.s32.totalorder %s207, %s209
      %p216 = scmp.eq.s32.totalorder %s31, 1
      %p217 = por %p215, %p216
      %p218 = scmp.ne.s32.totalorder %s209, %s210
      %p219 = scmp.eq.s32.totalorder %s31, 0
      %p220 = por %p218, %p219
      %p221 = scmp.ne.s32.totalorder %s209, %s210
      %p222 = scmp.eq.s32.totalorder %s32, 1
      %p223 = por %p221, %p222
      %p225 = scmp.ne.s32.totalorder %s210, %s224
      %p226 = scmp.eq.s32.totalorder %s32, 0
      %p227 = por %p225, %p226
      %s229 = sadd.s32 %s228, 1
      %p232 = scmp.eq.s32.totalorder %s26, 1
      %p233 = scmp.ne.s32.totalorder %s228, %s230
      %p234 = scmp.eq.s32.totalorder %s26, 0
      %p235 = por %p233, %p234
      %p236 = scmp.ne.s32.totalorder %s228, %s230
      %p237 = scmp.eq.s32.totalorder %s31, 1
      %p238 = por %p236, %p237
      %p239 = scmp.ne.s32.totalorder %s230, %s231
      %p240 = scmp.eq.s32.totalorder %s31, 0
      %p241 = por %p239, %p240
      %p242 = scmp.ne.s32.totalorder %s230, %s231
      %p243 = scmp.eq.s32.totalorder %s32, 1
      %p244 = por %p242, %p243
      %p246 = scmp.ne.s32.totalorder %s231, %s245
      %p247 = scmp.eq.s32.totalorder %s32, 0
      %p248 = por %p246, %p247
      %s250 = sadd.s32 %s249, 1
      %p253 = scmp.eq.s32.totalorder %s26, 1
      %p254 = scmp.ne.s32.totalorder %s249, %s251
      %p255 = scmp.eq.s32.totalorder %s26, 0
      %p256 = por %p254, %p255
      %p257 = scmp.ne.s32.totalorder %s249, %s251
      %p258 = scmp.eq.s32.totalorder %s31, 1
      %p259 = por %p257, %p258
      %p260 = scmp.ne.s32.totalorder %s251, %s252
      %p261 = scmp.eq.s32.totalorder %s31, 0
      %p262 = por %p260, %p261
      %p263 = scmp.ne.s32.totalorder %s251, %s252
      %p264 = scmp.eq.s32.totalorder %s32, 1
      %p265 = por %p263, %p264
      %p267 = scmp.ne.s32.totalorder %s252, %s266
      %p268 = scmp.eq.s32.totalorder %s32, 0
      %p269 = por %p267, %p268
      %s271 = sadd.s32 %s270, 1
      %p274 = scmp.eq.s32.totalorder %s26, 1
      %p275 = scmp.ne.s32.totalorder %s270, %s272
      %p276 = scmp.eq.s32.totalorder %s26, 0
      %p277 = por %p275, %p276
      %p278 = scmp.ne.s32.totalorder %s270, %s272
      %p279 = scmp.eq.s32.totalorder %s31, 1
      %p280 = por %p278, %p279
      %p281 = scmp.ne.s32.totalorder %s272, %s273
      %p282 = scmp.eq.s32.totalorder %s31, 0
      %p283 = por %p281, %p282
      %p284 = scmp.ne.s32.totalorder %s272, %s273
      %p285 = scmp.eq.s32.totalorder %s32, 1
      %p286 = por %p284, %p285
      %p288 = scmp.ne.s32.totalorder %s273, %s287
      %p289 = scmp.eq.s32.totalorder %s32, 0
      %p290 = por %p288, %p289
      %s292 = sadd.s32 %s291, 1
      %p295 = scmp.eq.s32.totalorder %s26, 1
      %p296 = scmp.ne.s32.totalorder %s291, %s293
      %p297 = scmp.eq.s32.totalorder %s26, 0
      %p298 = por %p296, %p297
      %p299 = scmp.ne.s32.totalorder %s291, %s293
      %p300 = scmp.eq.s32.totalorder %s31, 1
      %p301 = por %p299, %p300
      %p302 = scmp.ne.s32.totalorder %s293, %s294
      %p303 = scmp.eq.s32.totalorder %s31, 0
      %p304 = por %p302, %p303
      %p305 = scmp.ne.s32.totalorder %s293, %s294
      %p306 = scmp.eq.s32.totalorder %s32, 1
      %p307 = por %p305, %p306
      %p309 = scmp.ne.s32.totalorder %s294, %s308
      %p310 = scmp.eq.s32.totalorder %s32, 0
      %p311 = por %p309, %p310
      %s313 = sadd.s32 %s312, 1
      %p316 = scmp.eq.s32.totalorder %s26, 1
      %p317 = scmp.ne.s32.totalorder %s312, %s314
      %p318 = scmp.eq.s32.totalorder %s26, 0
      %p319 = por %p317, %p318
      %p320 = scmp.ne.s32.totalorder %s312, %s314
      %p321 = scmp.eq.s32.totalorder %s31, 1
      %p322 = por %p320, %p321
      %p323 = scmp.ne.s32.totalorder %s314, %s315
      %p324 = scmp.eq.s32.totalorder %s31, 0
      %p325 = por %p323, %p324
      %p326 = scmp.ne.s32.totalorder %s314, %s315
      %p327 = scmp.eq.s32.totalorder %s32, 1
      %p328 = por %p326, %p327
      %p330 = scmp.ne.s32.totalorder %s315, %s329
      %p331 = scmp.eq.s32.totalorder %s32, 0
      %p332 = por %p330, %p331
      %s333 = ssub.s32 %s26, %s33
      %p334 = scmp.eq.s32.totalorder %s333, 0
      %s336 = sadd.s32 %s335, 1
      %s337 = scalar_select %p334, %s335, %s336
      %p340 = pneg %p334
      %p341 = scmp.eq.s32.totalorder %s26, 1
      %p342 = por %p340, %p341
      %p343 = scmp.ne.s32.totalorder %s335, %s338
      %p344 = scmp.eq.s32.totalorder %s26, 0
      %p345 = por %p343, %p344
      %p346 = scmp.ne.s32.totalorder %s335, %s338
      %p347 = scmp.eq.s32.totalorder %s31, 1
      %p348 = por %p346, %p347
      %p349 = scmp.ne.s32.totalorder %s338, %s339
      %p350 = scmp.eq.s32.totalorder %s31, 0
      %p351 = por %p349, %p350
      %p352 = scmp.ne.s32.totalorder %s338, %s339
      %p353 = scmp.eq.s32.totalorder %s32, 1
      %p354 = por %p352, %p353
      %p356 = scmp.ne.s32.totalorder %s339, %s355
      %p357 = scmp.eq.s32.totalorder %s32, 0
      %p358 = por %p356, %p357
      %p359 = scmp.le.s32.totalorder 1, %s26
      %p360 = scmp.lt.s32.totalorder %s26, 3
      %p361 = pnand %p359, %p360
      %p362 = pneg %p361
      // Predicated region
      $region9: #{block_forward.1} parent=5 // pred_check
        _
      $region10: #{block_forward.1} parent=5 // pred_check_branch
        %364 = sbr.rel (%p361) target = $region12
      $region11: #{block_forward.1} parent=5 // pred_region
        %s365 = ssub.s32 %s26, 1
        // Predicated region
        $region13: #{block_forward.1} parent=11 // pred_check
          %p366 = pneg %p73
        $region14: #{block_forward.1} parent=11 // pred_check_branch
          %368 = sbr.rel (%p366) target = $region16
        $region15: #{block_forward.1} parent=11 // pred_region
          %s370 = ssub.s32 128, 128
          %371 = vsyncadd [#allocation4], %s370
          %s373 = sshll.u32 [#allocation3], 4
          %s374 = int_to_ptr.vmem [resolvable:$true] %s373
          %376 = dma.hbm_to_vmem [thread:$0]  %s1, 128, %s374, [#allocation4]
        $region16: #{block_forward.1} parent=11 // pred_fallthru
          _
        // Predicated region
        $region17: #{block_forward.1} parent=11 // pred_check
          %p377 = pneg %p94
        $region18: #{block_forward.1} parent=11 // pred_check_branch
          %379 = sbr.rel (%p377) target = $region20
        $region19: #{block_forward.1} parent=11 // pred_region
          _
        $region20: #{block_forward.1} parent=11 // pred_fallthru
          _
        // Predicated region
        $region21: #{block_forward.1} parent=11 // pred_check
          %p380 = pneg %p115
        $region22: #{block_forward.1} parent=11 // pred_check_branch
          %382 = sbr.rel (%p380) target = $region24
        $region23: #{block_forward.1} parent=11 // pred_region
          _
        $region24: #{block_forward.1} parent=11 // pred_fallthru
          _
        // Predicated region
        $region25: #{block_forward.1} parent=11 // pred_check
          %p383 = pneg %p136
        $region26: #{block_forward.1} parent=11 // pred_check_branch
          %385 = sbr.rel (%p383) target = $region28
        $region27: #{block_forward.1} parent=11 // pred_region
          _
        $region28: #{block_forward.1} parent=11 // pred_fallthru
          _
        // Predicated region
        $region29: #{block_forward.1} parent=11 // pred_check
          %p386 = pneg %p157
        $region30: #{block_forward.1} parent=11 // pred_check_branch
          %388 = sbr.rel (%p386) target = $region32
        $region31: #{block_forward.1} parent=11 // pred_region
          %s390 = ssub.s32 32, 32
          %391 = vsyncadd [#allocation7], %s390
          %s393 = sshll.u32 [#allocation6], 4
          %s394 = int_to_ptr.vmem [resolvable:$true] %s393
          %396 = dma.hbm_to_vmem [thread:$0]  %s5, 32, %s394, [#allocation7]
        $region32: #{block_forward.1} parent=11 // pred_fallthru
          _
        // Predicated region
        $region33: #{block_forward.1} parent=11 // pred_check
          %p397 = pneg %p178
        $region34: #{block_forward.1} parent=11 // pred_check_branch
          %399 = sbr.rel (%p397) target = $region36
        $region35: #{block_forward.1} parent=11 // pred_region
          _
        $region36: #{block_forward.1} parent=11 // pred_fallthru
          _
        // Predicated region
        $region37: #{block_forward.1} parent=11 // pred_check
          %p400 = pneg %p199
        $region38: #{block_forward.1} parent=11 // pred_check_branch
          %402 = sbr.rel (%p400) target = $region40
        $region39: #{block_forward.1} parent=11 // pred_region
          _
        $region40: #{block_forward.1} parent=11 // pred_fallthru
          _
        // Predicated region
        $region41: #{block_forward.1} parent=11 // pred_check
          %p403 = pneg %p220
        $region42: #{block_forward.1} parent=11 // pred_check_branch
          %405 = sbr.rel (%p403) target = $region44
        $region43: #{block_forward.1} parent=11 // pred_region
          _
        $region44: #{block_forward.1} parent=11 // pred_fallthru
          _
        // Predicated region
        $region45: #{block_forward.1} parent=11 // pred_check
          %p406 = pneg %p241
        $region46: #{block_forward.1} parent=11 // pred_check_branch
          %408 = sbr.rel (%p406) target = $region48
        $region47: #{block_forward.1} parent=11 // pred_region
          _
        $region48: #{block_forward.1} parent=11 // pred_fallthru
          _
        // Predicated region
        $region49: #{block_forward.1} parent=11 // pred_check
          %p409 = pneg %p262
        $region50: #{block_forward.1} parent=11 // pred_check_branch
          %411 = sbr.rel (%p409) target = $region52
        $region51: #{block_forward.1} parent=11 // pred_region
          _
        $region52: #{block_forward.1} parent=11 // pred_fallthru
          _
        // Predicated region
        $region53: #{block_forward.1} parent=11 // pred_check
          %p412 = pneg %p283
        $region54: #{block_forward.1} parent=11 // pred_check_branch
          %414 = sbr.rel (%p412) target = $region56
        $region55: #{block_forward.1} parent=11 // pred_region
          %s416 = ssub.s32 16, 16
          %417 = vsyncadd [#allocation7], %s416
          %s419 = sshll.u32 [#allocation8], 4
          %s420 = int_to_ptr.vmem [resolvable:$true] %s419
          %422 = dma.hbm_to_vmem [thread:$0]  %s11, 16, %s420, [#allocation7]
        $region56: #{block_forward.1} parent=11 // pred_fallthru
          _
        // Predicated region
        $region57: #{block_forward.1} parent=11 // pred_check
          %p423 = pneg %p304
        $region58: #{block_forward.1} parent=11 // pred_check_branch
          %425 = sbr.rel (%p423) target = $region60
        $region59: #{block_forward.1} parent=11 // pred_region
          _
        $region60: #{block_forward.1} parent=11 // pred_fallthru
          _
        // Predicated region
        $region61: #{block_forward.1} parent=11 // pred_check
          %p426 = pneg %p325
        $region62: #{block_forward.1} parent=11 // pred_check_branch
          %428 = sbr.rel (%p426) target = $region64
        $region63: #{block_forward.1} parent=11 // pred_region
          %s430 = ssub.s32 16, 16
          %431 = vsyncadd [#allocation10], %s430
          %s433 = sshll.u32 [#allocation9], 4
          %s434 = int_to_ptr.vmem [resolvable:$true] %s433
          %436 = dma.hbm_to_vmem [thread:$0]  %s13, 16, %s434, [#allocation10]
        $region64: #{block_forward.1} parent=11 // pred_fallthru
          _
      $region12: #{block_forward.1} parent=5 // pred_fallthru
        _
      %p437 = scmp.lt.s32.totalorder %s26, 2
      // Predicated region
      $region65: #{block_forward.1} parent=5 // pred_check
        %p438 = pneg %p437
      $region66: #{block_forward.1} parent=5 // pred_check_branch
        %440 = sbr.rel (%p438) target = $region68
      $region67: #{block_forward.1} parent=5 // pred_region
        // Predicated region
        $region69: #{block_forward.1} parent=67 // pred_check
          %p441 = pneg %p46
        $region70: #{block_forward.1} parent=67 // pred_check_branch
          %443 = sbr.rel (%p441) target = $region72
        $region71: #{block_forward.1} parent=67 // pred_region
          %p444 = scmp.lt.s32.totalorder %s26, 1
          %s445 = scalar_select %p444, %s26, 1
          %s446 = smul.addr %s445, 8
          %s447 = scalar_lea.vmem %s0, %s446
        $region72: #{block_forward.1} parent=67 // pred_fallthru
          _
      $region68: #{block_forward.1} parent=5 // pred_fallthru
        _
      %p448 = scmp.le.s32.totalorder 1, %s26
      %p449 = scmp.lt.s32.totalorder %s26, 3
      %p450 = pnand %p448, %p449
      %p451 = pneg %p450
      // Predicated region
      $region73: #{block_forward.1} parent=5 // pred_check
        _
      $region74: #{block_forward.1} parent=5 // pred_check_branch
        %453 = sbr.rel (%p450) target = $region76
      $region75: #{block_forward.1} parent=5 // pred_region
        %s454 = ssub.s32 %s26, 1
        // Predicated region
        $region77: #{block_forward.1} parent=75 // pred_check
          %p455 = pneg %p73
        $region78: #{block_forward.1} parent=75 // pred_check_branch
          %457 = sbr.rel (%p455) target = $region80
        $region79: #{block_forward.1} parent=75 // pred_region
          %458 = dma.done [#allocation4], 128
        $region80: #{block_forward.1} parent=75 // pred_fallthru
          _
        // Predicated region
        $region81: #{block_forward.1} parent=75 // pred_check
          %p459 = pneg %p157
        $region82: #{block_forward.1} parent=75 // pred_check_branch
          %461 = sbr.rel (%p459) target = $region84
        $region83: #{block_forward.1} parent=75 // pred_region
          %462 = dma.done [#allocation7], 32
        $region84: #{block_forward.1} parent=75 // pred_fallthru
          _
        // Predicated region
        $region85: #{block_forward.1} parent=75 // pred_check
          %p463 = pneg %p283
        $region86: #{block_forward.1} parent=75 // pred_check_branch
          %465 = sbr.rel (%p463) target = $region88
        $region87: #{block_forward.1} parent=75 // pred_region
          %466 = dma.done [#allocation7], 16
        $region88: #{block_forward.1} parent=75 // pred_fallthru
          _
        // Predicated region
        $region89: #{block_forward.1} parent=75 // pred_check
          %p467 = pneg %p325
        $region90: #{block_forward.1} parent=75 // pred_check_branch
          %469 = sbr.rel (%p467) target = $region92
        $region91: #{block_forward.1} parent=75 // pred_region
          %470 = dma.done [#allocation10], 16
        $region92: #{block_forward.1} parent=75 // pred_fallthru
          _
        %p471 = scmp.lt.s32.totalorder %s31, 1
        %s472 = scalar_select %p471, %s31, 1
        %s473 = smul.addr %s472, 8
        %s474 = scalar_lea.vmem %s0, %s473
        %p475 = pneg %p52
        %p476 = pneg %p49
        %p477 = pneg %p73
        %p478 = pneg %p70
        %p479 = pneg %p94
        %p480 = pneg %p91
        %p481 = pneg %p115
        %p482 = pneg %p112
        %p483 = pneg %p136
        %p484 = pneg %p133
        %p485 = pneg %p157
        %p486 = pneg %p154
        %p487 = pneg %p178
        %p488 = pneg %p175
        %p489 = pneg %p199
        %p490 = pneg %p196
        %p491 = pneg %p220
        %p492 = pneg %p217
        %p493 = pneg %p241
        %p494 = pneg %p238
        %p495 = pneg %p262
        %p496 = pneg %p259
        %p497 = pneg %p283
        %p498 = pneg %p280
        %p499 = pneg %p304
        %p500 = pneg %p301
        %p501 = pneg %p325
        %p502 = pneg %p322
        %p503 = pneg %p351
        %p504 = pneg %p348
        %s505 = sand.u32 %s338, 1
        %s506 = scalar_lea.sflag [#allocation5], %s505
        %s507 = sand.u32 %s338, 1
        %s508 = smul.addr %s507, 8
        %s509 = scalar_lea.vmem [#allocation11], %s508
        %p510 = scmp.lt.s32.totalorder %s31, 1
        %s511 = scalar_select %p510, %s31, 1
        %s512 = smul.addr %s511, 8
        %s513 = scalar_lea.vmem %s0, %s512
        %v515 = vld [vmem:[%s513] sm:$0xff]
        %v516 = vld [vmem:[%s2] sm:$0x1]
        %v517 = vld [vmem:[%s3] sm:$0x1]
        %vm518 = vcmask 261120
        %v519 = vsel %vm518, %v515, 0.0
        %520 = vadd.xlane.f32.xlu0 %v519
        %v521 = vpop.xlane.xlu0 %520
        %v522 = vrcp.pop 32.0
        %v523 = vmul.f32 %v521, %v522
        %v524 = vsub.f32 %v515, %v523
        %v525 = vmul.f32 %v524, %v524
        %v526 = vsel %vm518, %v525, 0.0
        %527 = vadd.xlane.f32.xlu0 %v526
        %v528 = vpop.xlane.xlu0 %527
        %v529 = vmul.f32 %v528, %v522
        %v530 = vadd.f32 %v529, 1e-05
        %v531 = vrsqrt.pop %v530
        %v532 = vmul.f32 %v524, %v531
        %v534 = vlaneseq
        %v535 = vshrl.u32 %v534, 7
        %v536 = vsub.s32 0, %v535
        %v537 = vrot.slane %v516, %v536
        %v539 = vmul.f32 %v532, %v537
        %v541 = vlaneseq
        %v542 = vshrl.u32 %v541, 7
        %v543 = vsub.s32 0, %v542
        %v544 = vrot.slane %v517, %v543
        %v546 = vadd.f32 %v539, %v544
        %v547 = vpack.c.bf16 %v546, %v546
        %v548 = vld [vmem:[%s4] sm:$0xff]
        %v549 = vld [vmem:[%s4 + $0x8] sm:$0xff]
        %v550 = vld [vmem:[%s4 + $0x10] sm:$0xff]
        %v551 = vld [vmem:[%s4 + $0x18] sm:$0xff]
        %v552 = vld [vmem:[#allocation6] sm:$0x3]
        %v554 = vlaneseq
        %v555 = vshrl.u32 %v554, 7
        %v556 = vsub.s32 0, %v555
        %v557 = vrot.slane %v552, %v556
        %v558 = vlaneseq
        %v559 = vshrl.u32 %v558, 7
        %v560 = vsub.s32 1, %v559
        %v561 = vrot.slane %v552, %v560
        %v568 = vunpack.c.l.b16 %v548
        %v569 = vunpack.c.h.b16 %v548
        %v570 = vunpack.c.l.b16 %v549
        %v571 = vunpack.c.h.b16 %v549
        %v572 = vunpack.c.l.b16 %v550
        %v573 = vunpack.c.h.b16 %v550
        %v574 = vunpack.c.l.b16 %v551
        %v575 = vunpack.c.h.b16 %v551
        %v576 = vpack.c.b16 %v570, %v568
        %v577 = vpack.c.b16 %v571, %v569
        %v578 = vpack.c.b16 %v574, %v572
        %v579 = vpack.c.b16 %v575, %v573
        %v585 = vsel %vm518, %v547, 0
        %587 = vmatprep.subr.bf16.mxu0 0
        %588 = vmatpush1.bf16.msra.mxu0 0
        %589 = vmatprep.subr.bf16.mxu0 0
        %590 = vmatpush1.bf16.msra.mxu0 0
        %591 = vmatprep.subr.bf16.mxu0 0
        %592 = vmatpush1.bf16.msra.mxu0 0
        %593 = vmatprep.subr.bf16.mxu0 0
        %594 = vmatpush1.bf16.msra.mxu0 0
        %595 = vmatprep.subr.bf16.mxu0 0
        %596 = vmatpush1.bf16.msra.mxu0 0
        %597 = vmatprep.subr.bf16.mxu0 0
        %598 = vmatpush1.bf16.msra.mxu0 0
        %599 = vmatprep.subr.bf16.mxu0 %v579
        %600 = vmatpush1.bf16.msra.mxu0 %v578
        %601 = vmatprep.subr.bf16.mxu0 %v577
        %602 = vmatpush1.bf16.msra.mxu0 %v576
        %603 = vmatprep.subr.bf16.mxu0 0
        %604 = vmatpush2.bf16.msra.mxu0 0
        %605 = vmatprep.subr.bf16.mxu0 0
        %606 = vmatpush2.bf16.msra.mxu0 0
        %607 = vmatprep.subr.bf16.mxu0 0
        %608 = vmatpush2.bf16.msra.mxu0 0
        %609 = vmatprep.subr.bf16.mxu0 0
        %610 = vmatpush2.bf16.msra.mxu0 0
        %611 = vmatprep.subr.bf16.mxu0 0
        %612 = vmatpush2.bf16.msra.mxu0 0
        %613 = vmatprep.subr.bf16.mxu0 0
        %614 = vmatpush2.bf16.msra.mxu0 0
        %615 = vmatprep.subr.bf16.mxu0 0
        %616 = vmatpush2.bf16.msra.mxu0 0
        %617 = vmatprep.subr.bf16.mxu0 0
        %618 = vmatpush2.bf16.msra.mxu0 0
        %619 = vmatprep.mubr.bf16.mxu0 0
        %620 = vmatmul.mubr.bf16.gmra.mxu0 %v585
        %v621 = vpop.f32.mrf.mxu0
        %v622 = vadd.f32 %v557, %v621
        %v623 = vpop.f32.mrf.mxu0
        %v624 = vadd.f32 %v561, %v623
        %v625 = vpop.f32.mrf.mxu0
        %v626 = vpop.f32.mrf.mxu0
        %627 = vdwg.mxu0
        %v628 = vld [vmem:[#allocation3] sm:$0xff]
        %v629 = vsub.f32 1.0, %v628
        %v630 = vmul.f32 %v622, %v628
        %632 = vrot.lane.b32.xlu0 %v629, 32
        %v633 = vpop.permute.xlu0 %632
        %v635 = vmul.f32 %v622, %v633
        %637 = vrot.lane.b32.xlu0 %v635, 96
        %v638 = vpop.permute.xlu0 %637
        %v640 = vadd.f32 %v630, %v638
        %642 = vrot.lane.b32.xlu0 %v628, 64
        %v643 = vpop.permute.xlu0 %642
        %v645 = vmul.f32 %v622, %v643
        %646 = vrot.lane.b32.xlu0 %v629, 96
        %v647 = vpop.permute.xlu0 %646
        %v649 = vmul.f32 %v622, %v647
        %651 = vrot.lane.b32.xlu0 %v649, 96
        %v652 = vpop.permute.xlu0 %651
        %v654 = vadd.f32 %v645, %v652
        %656 = vrot.lane.b32.xlu0 %v640, 120
        %v657 = vpop.permute.xlu0 %656
        %659 = vrot.lane.b32.xlu0 %v640, 112
        %v660 = vpop.permute.xlu0 %659
        %662 = vrot.lane.b32.xlu0 %v640, 104
        %v663 = vpop.permute.xlu0 %662
        %v665 = vpack.c.bf16 %v640, %v640
        %v666 = vpack.c.bf16 %v657, %v657
        %v667 = vpack.c.bf16 %v660, %v660
        %v668 = vpack.c.bf16 %v663, %v663
        %670 = vrot.lane.b32.xlu0 %v654, 120
        %v671 = vpop.permute.xlu0 %670
        %673 = vrot.lane.b32.xlu0 %v654, 112
        %v674 = vpop.permute.xlu0 %673
        %676 = vrot.lane.b32.xlu0 %v654, 104
        %v677 = vpop.permute.xlu0 %676
        %v679 = vpack.c.bf16 %v654, %v654
        %v680 = vpack.c.bf16 %v671, %v671
        %v681 = vpack.c.bf16 %v674, %v674
        %v682 = vpack.c.bf16 %v677, %v677
        %684 = vrot.lane.b32.xlu0 %v624, 120
        %v685 = vpop.permute.xlu0 %684
        %687 = vrot.lane.b32.xlu0 %v624, 112
        %v688 = vpop.permute.xlu0 %687
        %690 = vrot.lane.b32.xlu0 %v624, 104
        %v691 = vpop.permute.xlu0 %690
        %v693 = vpack.c.bf16 %v624, %v624
        %v694 = vpack.c.bf16 %v685, %v685
        %v695 = vpack.c.bf16 %v688, %v688
        %v696 = vpack.c.bf16 %v691, %v691
        %v697 = vlaneseq
        %v698 = vshrl.u32 %v697, 7
        %v699 = vlaneseq
        %v700 = vand.u32 %v699, 127
        %vm701 = vcmp.ge.s32.totalorder %v698, %v700
        %703 = vrot.lane.b32.xlu0 %v679, 64
        %v704 = vpop.permute.xlu0 %703
        %vm705 = vcmask 64512
        %v707 = vsel %vm705, %v665, 0
        %v710 = vsel %vm705, %v704, 0
        %712 = vmatprep.subr.bf16.mxu0 0
        %713 = vmatpush1.bf16.xpose.msra.mxu0 0
        %714 = vmatprep.subr.bf16.mxu0 0
        %715 = vmatpush1.bf16.xpose.msra.mxu0 0
        %716 = vmatprep.subr.bf16.mxu0 0
        %717 = vmatpush1.bf16.xpose.msra.mxu0 0
        %718 = vmatprep.subr.bf16.mxu0 0
        %719 = vmatpush1.bf16.xpose.msra.mxu0 0
        %720 = vmatprep.subr.bf16.mxu0 0
        %721 = vmatpush1.bf16.xpose.msra.mxu0 0
        %722 = vmatprep.subr.bf16.mxu0 0
        %723 = vmatpush1.bf16.xpose.msra.mxu0 0
        %724 = vmatprep.subr.bf16.mxu0 0
        %725 = vmatpush1.bf16.xpose.msra.mxu0 0
        %726 = vmatprep.subr.bf16.mxu0 0
        %727 = vmatpush1.bf16.xpose.msra.mxu0 %v710
        %728 = vmatprep.subr.bf16.mxu0 0
        %729 = vmatpush2.bf16.xpose.msra.mxu0 0
        %730 = vmatprep.subr.bf16.mxu0 0
        %731 = vmatpush2.bf16.xpose.msra.mxu0 0
        %732 = vmatprep.subr.bf16.mxu0 0
        %733 = vmatpush2.bf16.xpose.msra.mxu0 0
        %734 = vmatprep.subr.bf16.mxu0 0
        %735 = vmatpush2.bf16.xpose.msra.mxu0 0
        %736 = vmatprep.subr.bf16.mxu0 0
        %737 = vmatpush2.bf16.xpose.msra.mxu0 0
        %738 = vmatprep.subr.bf16.mxu0 0
        %739 = vmatpush2.bf16.xpose.msra.mxu0 0
        %740 = vmatprep.subr.bf16.mxu0 0
        %741 = vmatpush2.bf16.xpose.msra.mxu0 0
        %742 = vmatprep.subr.bf16.mxu0 0
        %743 = vmatpush2.bf16.xpose.msra.mxu0 0
        %744 = vmatprep.mubr.bf16.mxu0 0
        %745 = vmatmul.mubr.bf16.gmra.mxu0 %v707
        %v746 = vpop.f32.mrf.mxu0
        %v747 = vadd.f32 0.0, %v746
        %v748 = vpop.f32.mrf.mxu0
        %v749 = vpop.f32.mrf.mxu0
        %v750 = vpop.f32.mrf.mxu0
        %751 = vdwg.mxu0
        %753 = vrot.lane.b32.xlu0 %v680, 64
        %v754 = vpop.permute.xlu0 %753
        %v756 = vsel %vm705, %v666, 0
        %v759 = vsel %vm705, %v754, 0
        %761 = vmatprep.subr.bf16.mxu0 0
        %762 = vmatpush1.bf16.xpose.msra.mxu0 0
        %763 = vmatprep.subr.bf16.mxu0 0
        %764 = vmatpush1.bf16.xpose.msra.mxu0 0
        %765 = vmatprep.subr.bf16.mxu0 0
        %766 = vmatpush1.bf16.xpose.msra.mxu0 0
        %767 = vmatprep.subr.bf16.mxu0 0
        %768 = vmatpush1.bf16.xpose.msra.mxu0 0
        %769 = vmatprep.subr.bf16.mxu0 0
        %770 = vmatpush1.bf16.xpose.msra.mxu0 0
        %771 = vmatprep.subr.bf16.mxu0 0
        %772 = vmatpush1.bf16.xpose.msra.mxu0 0
        %773 = vmatprep.subr.bf16.mxu0 0
        %774 = vmatpush1.bf16.xpose.msra.mxu0 0
        %775 = vmatprep.subr.bf16.mxu0 0
        %776 = vmatpush1.bf16.xpose.msra.mxu0 %v759
        %777 = vmatprep.subr.bf16.mxu0 0
        %778 = vmatpush2.bf16.xpose.msra.mxu0 0
        %779 = vmatprep.subr.bf16.mxu0 0
        %780 = vmatpush2.bf16.xpose.msra.mxu0 0
        %781 = vmatprep.subr.bf16.mxu0 0
        %782 = vmatpush2.bf16.xpose.msra.mxu0 0
        %783 = vmatprep.subr.bf16.mxu0 0
        %784 = vmatpush2.bf16.xpose.msra.mxu0 0
        %785 = vmatprep.subr.bf16.mxu0 0
        %786 = vmatpush2.bf16.xpose.msra.mxu0 0
        %787 = vmatprep.subr.bf16.mxu0 0
        %788 = vmatpush2.bf16.xpose.msra.mxu0 0
        %789 = vmatprep.subr.bf16.mxu0 0
        %790 = vmatpush2.bf16.xpose.msra.mxu0 0
        %791 = vmatprep.subr.bf16.mxu0 0
        %792 = vmatpush2.bf16.xpose.msra.mxu0 0
        %793 = vmatprep.mubr.bf16.mxu0 0
        %794 = vmatmul.mubr.bf16.gmra.mxu0 %v756
        %v795 = vpop.f32.mrf.mxu0
        %v796 = vadd.f32 0.0, %v795
        %v797 = vpop.f32.mrf.mxu0
        %v798 = vpop.f32.mrf.mxu0
        %v799 = vpop.f32.mrf.mxu0
        %800 = vdwg.mxu0
        %802 = vrot.lane.b32.xlu0 %v681, 64
        %v803 = vpop.permute.xlu0 %802
        %v805 = vsel %vm705, %v667, 0
        %v808 = vsel %vm705, %v803, 0
        %810 = vmatprep.subr.bf16.mxu0 0
        %811 = vmatpush1.bf16.xpose.msra.mxu0 0
        %812 = vmatprep.subr.bf16.mxu0 0
        %813 = vmatpush1.bf16.xpose.msra.mxu0 0
        %814 = vmatprep.subr.bf16.mxu0 0
        %815 = vmatpush1.bf16.xpose.msra.mxu0 0
        %816 = vmatprep.subr.bf16.mxu0 0
        %817 = vmatpush1.bf16.xpose.msra.mxu0 0
        %818 = vmatprep.subr.bf16.mxu0 0
        %819 = vmatpush1.bf16.xpose.msra.mxu0 0
        %820 = vmatprep.subr.bf16.mxu0 0
        %821 = vmatpush1.bf16.xpose.msra.mxu0 0
        %822 = vmatprep.subr.bf16.mxu0 0
        %823 = vmatpush1.bf16.xpose.msra.mxu0 0
        %824 = vmatprep.subr.bf16.mxu0 0
        %825 = vmatpush1.bf16.xpose.msra.mxu0 %v808
        %826 = vmatprep.subr.bf16.mxu0 0
        %827 = vmatpush2.bf16.xpose.msra.mxu0 0
        %828 = vmatprep.subr.bf16.mxu0 0
        %829 = vmatpush2.bf16.xpose.msra.mxu0 0
        %830 = vmatprep.subr.bf16.mxu0 0
        %831 = vmatpush2.bf16.xpose.msra.mxu0 0
        %832 = vmatprep.subr.bf16.mxu0 0
        %833 = vmatpush2.bf16.xpose.msra.mxu0 0
        %834 = vmatprep.subr.bf16.mxu0 0
        %835 = vmatpush2.bf16.xpose.msra.mxu0 0
        %836 = vmatprep.subr.bf16.mxu0 0
        %837 = vmatpush2.bf16.xpose.msra.mxu0 0
        %838 = vmatprep.subr.bf16.mxu0 0
        %839 = vmatpush2.bf16.xpose.msra.mxu0 0
        %840 = vmatprep.subr.bf16.mxu0 0
        %841 = vmatpush2.bf16.xpose.msra.mxu0 0
        %842 = vmatprep.mubr.bf16.mxu0 0
        %843 = vmatmul.mubr.bf16.gmra.mxu0 %v805
        %v844 = vpop.f32.mrf.mxu0
        %v845 = vadd.f32 0.0, %v844
        %v846 = vpop.f32.mrf.mxu0
        %v847 = vpop.f32.mrf.mxu0
        %v848 = vpop.f32.mrf.mxu0
        %849 = vdwg.mxu0
        %851 = vrot.lane.b32.xlu0 %v682, 64
        %v852 = vpop.permute.xlu0 %851
        %v854 = vsel %vm705, %v668, 0
        %v857 = vsel %vm705, %v852, 0
        %859 = vmatprep.subr.bf16.mxu0 0
        %860 = vmatpush1.bf16.xpose.msra.mxu0 0
        %861 = vmatprep.subr.bf16.mxu0 0
        %862 = vmatpush1.bf16.xpose.msra.mxu0 0
        %863 = vmatprep.subr.bf16.mxu0 0
        %864 = vmatpush1.bf16.xpose.msra.mxu0 0
        %865 = vmatprep.subr.bf16.mxu0 0
        %866 = vmatpush1.bf16.xpose.msra.mxu0 0
        %867 = vmatprep.subr.bf16.mxu0 0
        %868 = vmatpush1.bf16.xpose.msra.mxu0 0
        %869 = vmatprep.subr.bf16.mxu0 0
        %870 = vmatpush1.bf16.xpose.msra.mxu0 0
        %871 = vmatprep.subr.bf16.mxu0 0
        %872 = vmatpush1.bf16.xpose.msra.mxu0 0
        %873 = vmatprep.subr.bf16.mxu0 0
        %874 = vmatpush1.bf16.xpose.msra.mxu0 %v857
        %875 = vmatprep.subr.bf16.mxu0 0
        %876 = vmatpush2.bf16.xpose.msra.mxu0 0
        %877 = vmatprep.subr.bf16.mxu0 0
        %878 = vmatpush2.bf16.xpose.msra.mxu0 0
        %879 = vmatprep.subr.bf16.mxu0 0
        %880 = vmatpush2.bf16.xpose.msra.mxu0 0
        %881 = vmatprep.subr.bf16.mxu0 0
        %882 = vmatpush2.bf16.xpose.msra.mxu0 0
        %883 = vmatprep.subr.bf16.mxu0 0
        %884 = vmatpush2.bf16.xpose.msra.mxu0 0
        %885 = vmatprep.subr.bf16.mxu0 0
        %886 = vmatpush2.bf16.xpose.msra.mxu0 0
        %887 = vmatprep.subr.bf16.mxu0 0
        %888 = vmatpush2.bf16.xpose.msra.mxu0 0
        %889 = vmatprep.subr.bf16.mxu0 0
        %890 = vmatpush2.bf16.xpose.msra.mxu0 0
        %891 = vmatprep.mubr.bf16.mxu0 0
        %892 = vmatmul.mubr.bf16.gmra.mxu0 %v854
        %v893 = vpop.f32.mrf.mxu0
        %v894 = vadd.f32 0.0, %v893
        %v895 = vpop.f32.mrf.mxu0
        %v896 = vpop.f32.mrf.mxu0
        %v897 = vpop.f32.mrf.mxu0
        %898 = vdwg.mxu0
        %v899 = vsel %vm701, 1, 0
        %vm900 = vcmp.eq.s32.totalorder %v899, 1
        %v901 = vsel %vm900, %v747, -1e+30
        %v902 = vsel %vm900, %v796, -1e+30
        %v903 = vsel %vm900, %v845, -1e+30
        %v904 = vsel %vm900, %v894, -1e+30
        %v905 = vsel %vm705, %v901, -inf
        %906 = vmax.xlane.f32.xlu0 %v905
        %v907 = vpop.xlane.xlu0 %906
        %v908 = vsel %vm705, %v902, -inf
        %909 = vmax.xlane.f32.xlu0 %v908
        %v910 = vpop.xlane.xlu0 %909
        %v911 = vsel %vm705, %v903, -inf
        %912 = vmax.xlane.f32.xlu0 %v911
        %v913 = vpop.xlane.xlu0 %912
        %v914 = vsel %vm705, %v904, -inf
        %915 = vmax.xlane.f32.xlu0 %v914
        %v916 = vpop.xlane.xlu0 %915
        %v917 = vsub.f32 %v901, %v907
        %v918 = vsub.f32 %v902, %v910
        %v919 = vsub.f32 %v903, %v913
        %v920 = vsub.f32 %v904, %v916
        %v921 = vmul.f32 %v917, 1.442695
        %v922 = vpow.pop %v921
        %v923 = vmul.f32 %v918, 1.442695
        %v924 = vpow.pop %v923
        %v925 = vmul.f32 %v919, 1.442695
        %v926 = vpow.pop %v925
        %v927 = vmul.f32 %v920, 1.442695
        %v928 = vpow.pop %v927
        %v929 = vsel %vm705, %v922, 0.0
        %930 = vadd.xlane.f32.xlu0 %v929
        %v931 = vpop.xlane.xlu0 %930
        %v932 = vsel %vm705, %v924, 0.0
        %933 = vadd.xlane.f32.xlu0 %v932
        %v934 = vpop.xlane.xlu0 %933
        %v935 = vsel %vm705, %v926, 0.0
        %936 = vadd.xlane.f32.xlu0 %v935
        %v937 = vpop.xlane.xlu0 %936
        %v938 = vsel %vm705, %v928, 0.0
        %939 = vadd.xlane.f32.xlu0 %v938
        %v940 = vpop.xlane.xlu0 %939
        %v941 = vrcp.pop %v931
        %v942 = vrcp.pop %v934
        %v943 = vrcp.pop %v937
        %v944 = vrcp.pop %v940
        %v945 = vmul.f32 %v922, %v941
        %v946 = vmul.f32 %v924, %v942
        %v947 = vmul.f32 %v926, %v943
        %v948 = vmul.f32 %v928, %v944
        %v949 = vpack.c.bf16 %v945, %v945
        %v950 = vpack.c.bf16 %v946, %v946
        %v951 = vpack.c.bf16 %v947, %v947
        %v952 = vpack.c.bf16 %v948, %v948
        %v954 = vsel %vm705, %v949, 0
        %vm956 = vcmask 1043456
        %v958 = vsel %vm956, %v693, 0
        %960 = vmatprep.subr.bf16.mxu0 0
        %961 = vmatpush1.bf16.msra.mxu0 0
        %962 = vmatprep.subr.bf16.mxu0 0
        %963 = vmatpush1.bf16.msra.mxu0 0
        %964 = vmatprep.subr.bf16.mxu0 0
        %965 = vmatpush1.bf16.msra.mxu0 0
        %966 = vmatprep.subr.bf16.mxu0 0
        %967 = vmatpush1.bf16.msra.mxu0 0
        %968 = vmatprep.subr.bf16.mxu0 0
        %969 = vmatpush1.bf16.msra.mxu0 0
        %970 = vmatprep.subr.bf16.mxu0 0
        %971 = vmatpush1.bf16.msra.mxu0 0
        %972 = vmatprep.subr.bf16.mxu0 0
        %973 = vmatpush1.bf16.msra.mxu0 0
        %974 = vmatprep.subr.bf16.mxu0 0
        %975 = vmatpush1.bf16.msra.mxu0 %v958
        %976 = vmatprep.subr.bf16.mxu0 0
        %977 = vmatpush2.bf16.msra.mxu0 0
        %978 = vmatprep.subr.bf16.mxu0 0
        %979 = vmatpush2.bf16.msra.mxu0 0
        %980 = vmatprep.subr.bf16.mxu0 0
        %981 = vmatpush2.bf16.msra.mxu0 0
        %982 = vmatprep.subr.bf16.mxu0 0
        %983 = vmatpush2.bf16.msra.mxu0 0
        %984 = vmatprep.subr.bf16.mxu0 0
        %985 = vmatpush2.bf16.msra.mxu0 0
        %986 = vmatprep.subr.bf16.mxu0 0
        %987 = vmatpush2.bf16.msra.mxu0 0
        %988 = vmatprep.subr.bf16.mxu0 0
        %989 = vmatpush2.bf16.msra.mxu0 0
        %990 = vmatprep.subr.bf16.mxu0 0
        %991 = vmatpush2.bf16.msra.mxu0 0
        %992 = vmatprep.mubr.bf16.mxu0 0
        %993 = vmatmul.mubr.bf16.gmra.mxu0 %v954
        %v994 = vpop.f32.mrf.mxu0
        %v995 = vadd.f32 0.0, %v994
        %v996 = vpop.f32.mrf.mxu0
        %v997 = vpop.f32.mrf.mxu0
        %v998 = vpop.f32.mrf.mxu0
        %999 = vdwg.mxu0
        %v1001 = vsel %vm705, %v950, 0
        %v1004 = vsel %vm956, %v694, 0
        %1006 = vmatprep.subr.bf16.mxu0 0
        %1007 = vmatpush1.bf16.msra.mxu0 0
        %1008 = vmatprep.subr.bf16.mxu0 0
        %1009 = vmatpush1.bf16.msra.mxu0 0
        %1010 = vmatprep.subr.bf16.mxu0 0
        %1011 = vmatpush1.bf16.msra.mxu0 0
        %1012 = vmatprep.subr.bf16.mxu0 0
        %1013 = vmatpush1.bf16.msra.mxu0 0
        %1014 = vmatprep.subr.bf16.mxu0 0
        %1015 = vmatpush1.bf16.msra.mxu0 0
        %1016 = vmatprep.subr.bf16.mxu0 0
        %1017 = vmatpush1.bf16.msra.mxu0 0
        %1018 = vmatprep.subr.bf16.mxu0 0
        %1019 = vmatpush1.bf16.msra.mxu0 0
        %1020 = vmatprep.subr.bf16.mxu0 0
        %1021 = vmatpush1.bf16.msra.mxu0 %v1004
        %1022 = vmatprep.subr.bf16.mxu0 0
        %1023 = vmatpush2.bf16.msra.mxu0 0
        %1024 = vmatprep.subr.bf16.mxu0 0
        %1025 = vmatpush2.bf16.msra.mxu0 0
        %1026 = vmatprep.subr.bf16.mxu0 0
        %1027 = vmatpush2.bf16.msra.mxu0 0
        %1028 = vmatprep.subr.bf16.mxu0 0
        %1029 = vmatpush2.bf16.msra.mxu0 0
        %1030 = vmatprep.subr.bf16.mxu0 0
        %1031 = vmatpush2.bf16.msra.mxu0 0
        %1032 = vmatprep.subr.bf16.mxu0 0
        %1033 = vmatpush2.bf16.msra.mxu0 0
        %1034 = vmatprep.subr.bf16.mxu0 0
        %1035 = vmatpush2.bf16.msra.mxu0 0
        %1036 = vmatprep.subr.bf16.mxu0 0
        %1037 = vmatpush2.bf16.msra.mxu0 0
        %1038 = vmatprep.mubr.bf16.mxu0 0
        %1039 = vmatmul.mubr.bf16.gmra.mxu0 %v1001
        %v1040 = vpop.f32.mrf.mxu0
        %v1041 = vadd.f32 0.0, %v1040
        %v1042 = vpop.f32.mrf.mxu0
        %v1043 = vpop.f32.mrf.mxu0
        %v1044 = vpop.f32.mrf.mxu0
        %1045 = vdwg.mxu0
        %v1047 = vsel %vm705, %v951, 0
        %v1050 = vsel %vm956, %v695, 0
        %1052 = vmatprep.subr.bf16.mxu0 0
        %1053 = vmatpush1.bf16.msra.mxu0 0
        %1054 = vmatprep.subr.bf16.mxu0 0
        %1055 = vmatpush1.bf16.msra.mxu0 0
        %1056 = vmatprep.subr.bf16.mxu0 0
        %1057 = vmatpush1.bf16.msra.mxu0 0
        %1058 = vmatprep.subr.bf16.mxu0 0
        %1059 = vmatpush1.bf16.msra.mxu0 0
        %1060 = vmatprep.subr.bf16.mxu0 0
        %1061 = vmatpush1.bf16.msra.mxu0 0
        %1062 = vmatprep.subr.bf16.mxu0 0
        %1063 = vmatpush1.bf16.msra.mxu0 0
        %1064 = vmatprep.subr.bf16.mxu0 0
        %1065 = vmatpush1.bf16.msra.mxu0 0
        %1066 = vmatprep.subr.bf16.mxu0 0
        %1067 = vmatpush1.bf16.msra.mxu0 %v1050
        %1068 = vmatprep.subr.bf16.mxu0 0
        %1069 = vmatpush2.bf16.msra.mxu0 0
        %1070 = vmatprep.subr.bf16.mxu0 0
        %1071 = vmatpush2.bf16.msra.mxu0 0
        %1072 = vmatprep.subr.bf16.mxu0 0
        %1073 = vmatpush2.bf16.msra.mxu0 0
        %1074 = vmatprep.subr.bf16.mxu0 0
        %1075 = vmatpush2.bf16.msra.mxu0 0
        %1076 = vmatprep.subr.bf16.mxu0 0
        %1077 = vmatpush2.bf16.msra.mxu0 0
        %1078 = vmatprep.subr.bf16.mxu0 0
        %1079 = vmatpush2.bf16.msra.mxu0 0
        %1080 = vmatprep.subr.bf16.mxu0 0
        %1081 = vmatpush2.bf16.msra.mxu0 0
        %1082 = vmatprep.subr.bf16.mxu0 0
        %1083 = vmatpush2.bf16.msra.mxu0 0
        %1084 = vmatprep.mubr.bf16.mxu0 0
        %1085 = vmatmul.mubr.bf16.gmra.mxu0 %v1047
        %v1086 = vpop.f32.mrf.mxu0
        %v1087 = vadd.f32 0.0, %v1086
        %v1088 = vpop.f32.mrf.mxu0
        %v1089 = vpop.f32.mrf.mxu0
        %v1090 = vpop.f32.mrf.mxu0
        %1091 = vdwg.mxu0
        %v1093 = vsel %vm705, %v952, 0
        %v1096 = vsel %vm956, %v696, 0
        %1098 = vmatprep.subr.bf16.mxu0 0
        %1099 = vmatpush1.bf16.msra.mxu0 0
        %1100 = vmatprep.subr.bf16.mxu0 0
        %1101 = vmatpush1.bf16.msra.mxu0 0
        %1102 = vmatprep.subr.bf16.mxu0 0
        %1103 = vmatpush1.bf16.msra.mxu0 0
        %1104 = vmatprep.subr.bf16.mxu0 0
        %1105 = vmatpush1.bf16.msra.mxu0 0
        %1106 = vmatprep.subr.bf16.mxu0 0
        %1107 = vmatpush1.bf16.msra.mxu0 0
        %1108 = vmatprep.subr.bf16.mxu0 0
        %1109 = vmatpush1.bf16.msra.mxu0 0
        %1110 = vmatprep.subr.bf16.mxu0 0
        %1111 = vmatpush1.bf16.msra.mxu0 0
        %1112 = vmatprep.subr.bf16.mxu0 0
        %1113 = vmatpush1.bf16.msra.mxu0 %v1096
        %1114 = vmatprep.subr.bf16.mxu0 0
        %1115 = vmatpush2.bf16.msra.mxu0 0
        %1116 = vmatprep.subr.bf16.mxu0 0
        %1117 = vmatpush2.bf16.msra.mxu0 0
        %1118 = vmatprep.subr.bf16.mxu0 0
        %1119 = vmatpush2.bf16.msra.mxu0 0
        %1120 = vmatprep.subr.bf16.mxu0 0
        %1121 = vmatpush2.bf16.msra.mxu0 0
        %1122 = vmatprep.subr.bf16.mxu0 0
        %1123 = vmatpush2.bf16.msra.mxu0 0
        %1124 = vmatprep.subr.bf16.mxu0 0
        %1125 = vmatpush2.bf16.msra.mxu0 0
        %1126 = vmatprep.subr.bf16.mxu0 0
        %1127 = vmatpush2.bf16.msra.mxu0 0
        %1128 = vmatprep.subr.bf16.mxu0 0
        %1129 = vmatpush2.bf16.msra.mxu0 0
        %1130 = vmatprep.mubr.bf16.mxu0 0
        %1131 = vmatmul.mubr.bf16.gmra.mxu0 %v1093
        %v1132 = vpop.f32.mrf.mxu0
        %v1133 = vadd.f32 0.0, %v1132
        %v1134 = vpop.f32.mrf.mxu0
        %v1135 = vpop.f32.mrf.mxu0
        %v1136 = vpop.f32.mrf.mxu0
        %1137 = vdwg.mxu0
        %1138 = vst.msk [vmem:[#allocation2] sm:$0xff] %vm705, %v995
        %1140 = vrot.lane.b32.xlu0 %v1041, 8
        %v1141 = vpop.permute.xlu0 %1140
        %vm1143 = vcmask 130112
        %1144 = vst.msk [vmem:[#allocation2] sm:$0xff] %vm1143, %v1141
        %1146 = vrot.lane.b32.xlu0 %v1087, 16
        %v1147 = vpop.permute.xlu0 %1146
        %vm1149 = vcmask 195712
        %1150 = vst.msk [vmem:[#allocation2] sm:$0xff] %vm1149, %v1147
        %1152 = vrot.lane.b32.xlu0 %v1133, 24
        %v1153 = vpop.permute.xlu0 %1152
        %vm1155 = vcmask 261312
        %1156 = vst.msk [vmem:[#allocation2] sm:$0xff] %vm1155, %v1153
        %v1157 = vld [vmem:[#allocation2] sm:$0xff]
        %v1158 = vpack.c.bf16 %v1157, %v1157
        %v1159 = vld [vmem:[%s6] sm:$0xf]
        %v1160 = vld [vmem:[%s6 + $0x4] sm:$0xf]
        %v1161 = vld [vmem:[%s6 + $0x8] sm:$0xf]
        %v1162 = vld [vmem:[%s6 + $0xc] sm:$0xf]
        %v1163 = vld [vmem:[%s7] sm:$0x1]
        %v1165 = vlaneseq
        %v1166 = vshrl.u32 %v1165, 7
        %v1167 = vsub.s32 0, %v1166
        %v1168 = vrot.slane %v1163, %v1167
        %v1174 = vunpack.c.l.b16 %v1159
        %v1175 = vunpack.c.l.b16 %v1160
        %v1176 = vunpack.c.l.b16 %v1161
        %v1177 = vunpack.c.l.b16 %v1162
        %v1178 = vpack.c.b16 %v1175, %v1174
        %v1179 = vpack.c.b16 %v1177, %v1176
        %v1183 = vsel %vm518, %v1158, 0
        %1185 = vmatprep.subr.bf16.mxu0 0
        %1186 = vmatpush1.bf16.msra.mxu0 0
        %1187 = vmatprep.subr.bf16.mxu0 0
        %1188 = vmatpush1.bf16.msra.mxu0 0
        %1189 = vmatprep.subr.bf16.mxu0 0
        %1190 = vmatpush1.bf16.msra.mxu0 0
        %1191 = vmatprep.subr.bf16.mxu0 0
        %1192 = vmatpush1.bf16.msra.mxu0 0
        %1193 = vmatprep.subr.bf16.mxu0 0
        %1194 = vmatpush1.bf16.msra.mxu0 0
        %1195 = vmatprep.subr.bf16.mxu0 0
        %1196 = vmatpush1.bf16.msra.mxu0 0
        %1197 = vmatprep.subr.bf16.mxu0 0
        %1198 = vmatpush1.bf16.msra.mxu0 %v1179
        %1199 = vmatprep.subr.bf16.mxu0 0
        %1200 = vmatpush1.bf16.msra.mxu0 %v1178
        %1201 = vmatprep.subr.bf16.mxu0 0
        %1202 = vmatpush2.bf16.msra.mxu0 0
        %1203 = vmatprep.subr.bf16.mxu0 0
        %1204 = vmatpush2.bf16.msra.mxu0 0
        %1205 = vmatprep.subr.bf16.mxu0 0
        %1206 = vmatpush2.bf16.msra.mxu0 0
        %1207 = vmatprep.subr.bf16.mxu0 0
        %1208 = vmatpush2.bf16.msra.mxu0 0
        %1209 = vmatprep.subr.bf16.mxu0 0
        %1210 = vmatpush2.bf16.msra.mxu0 0
        %1211 = vmatprep.subr.bf16.mxu0 0
        %1212 = vmatpush2.bf16.msra.mxu0 0
        %1213 = vmatprep.subr.bf16.mxu0 0
        %1214 = vmatpush2.bf16.msra.mxu0 0
        %1215 = vmatprep.subr.bf16.mxu0 0
        %1216 = vmatpush2.bf16.msra.mxu0 0
        %1217 = vmatprep.mubr.bf16.mxu0 0
        %1218 = vmatmul.mubr.bf16.gmra.mxu0 %v1183
        %v1219 = vpop.f32.mrf.mxu0
        %v1220 = vadd.f32 %v1168, %v1219
        %v1221 = vpop.f32.mrf.mxu0
        %v1222 = vpop.f32.mrf.mxu0
        %v1223 = vpop.f32.mrf.mxu0
        %1224 = vdwg.mxu0
        %v1225 = vadd.f32 %v515, %v1220
        %v1226 = vld [vmem:[%s8] sm:$0x1]
        %v1227 = vld [vmem:[%s9] sm:$0x1]
        %v1228 = vsel %vm518, %v1225, 0.0
        %1229 = vadd.xlane.f32.xlu0 %v1228
        %v1230 = vpop.xlane.xlu0 %1229
        %v1231 = vmul.f32 %v1230, %v522
        %v1232 = vsub.f32 %v1225, %v1231
        %v1233 = vmul.f32 %v1232, %v1232
        %v1234 = vsel %vm518, %v1233, 0.0
        %1235 = vadd.xlane.f32.xlu0 %v1234
        %v1236 = vpop.xlane.xlu0 %1235
        %v1237 = vmul.f32 %v1236, %v522
        %v1238 = vadd.f32 %v1237, 1e-05
        %v1239 = vrsqrt.pop %v1238
        %v1240 = vmul.f32 %v1232, %v1239
        %v1242 = vlaneseq
        %v1243 = vshrl.u32 %v1242, 7
        %v1244 = vsub.s32 0, %v1243
        %v1245 = vrot.slane %v1226, %v1244
        %v1247 = vmul.f32 %v1240, %v1245
        %v1249 = vlaneseq
        %v1250 = vshrl.u32 %v1249, 7
        %v1251 = vsub.s32 0, %v1250
        %v1252 = vrot.slane %v1227, %v1251
        %v1254 = vadd.f32 %v1247, %v1252
        %v1255 = vpack.c.bf16 %v1254, %v1254
        %v1256 = vld [vmem:[%s10] sm:$0xf]
        %v1257 = vld [vmem:[%s10 + $0x4] sm:$0xf]
        %v1258 = vld [vmem:[%s10 + $0x8] sm:$0xf]
        %v1259 = vld [vmem:[%s10 + $0xc] sm:$0xf]
        %v1260 = vld [vmem:[#allocation8] sm:$0x1]
        %v1262 = vlaneseq
        %v1263 = vshrl.u32 %v1262, 7
        %v1264 = vsub.s32 0, %v1263
        %v1265 = vrot.slane %v1260, %v1264
        %v1271 = vunpack.c.l.b16 %v1256
        %v1272 = vunpack.c.l.b16 %v1257
        %v1273 = vunpack.c.l.b16 %v1258
        %v1274 = vunpack.c.l.b16 %v1259
        %v1275 = vpack.c.b16 %v1272, %v1271
        %v1276 = vpack.c.b16 %v1274, %v1273
        %v1280 = vsel %vm518, %v1255, 0
        %1282 = vmatprep.subr.bf16.mxu0 0
        %1283 = vmatpush1.bf16.msra.mxu0 0
        %1284 = vmatprep.subr.bf16.mxu0 0
        %1285 = vmatpush1.bf16.msra.mxu0 0
        %1286 = vmatprep.subr.bf16.mxu0 0
        %1287 = vmatpush1.bf16.msra.mxu0 0
        %1288 = vmatprep.subr.bf16.mxu0 0
        %1289 = vmatpush1.bf16.msra.mxu0 0
        %1290 = vmatprep.subr.bf16.mxu0 0
        %1291 = vmatpush1.bf16.msra.mxu0 0
        %1292 = vmatprep.subr.bf16.mxu0 0
        %1293 = vmatpush1.bf16.msra.mxu0 0
        %1294 = vmatprep.subr.bf16.mxu0 0
        %1295 = vmatpush1.bf16.msra.mxu0 %v1276
        %1296 = vmatprep.subr.bf16.mxu0 0
        %1297 = vmatpush1.bf16.msra.mxu0 %v1275
        %1298 = vmatprep.subr.bf16.mxu0 0
        %1299 = vmatpush2.bf16.msra.mxu0 0
        %1300 = vmatprep.subr.bf16.mxu0 0
        %1301 = vmatpush2.bf16.msra.mxu0 0
        %1302 = vmatprep.subr.bf16.mxu0 0
        %1303 = vmatpush2.bf16.msra.mxu0 0
        %1304 = vmatprep.subr.bf16.mxu0 0
        %1305 = vmatpush2.bf16.msra.mxu0 0
        %1306 = vmatprep.subr.bf16.mxu0 0
        %1307 = vmatpush2.bf16.msra.mxu0 0
        %1308 = vmatprep.subr.bf16.mxu0 0
        %1309 = vmatpush2.bf16.msra.mxu0 0
        %1310 = vmatprep.subr.bf16.mxu0 0
        %1311 = vmatpush2.bf16.msra.mxu0 0
        %1312 = vmatprep.subr.bf16.mxu0 0
        %1313 = vmatpush2.bf16.msra.mxu0 0
        %1314 = vmatprep.mubr.bf16.mxu0 0
        %1315 = vmatmul.mubr.bf16.gmra.mxu0 %v1280
        %v1316 = vpop.f32.mrf.mxu0
        %v1317 = vadd.f32 %v1265, %v1316
        %v1318 = vpop.f32.mrf.mxu0
        %v1319 = vpop.f32.mrf.mxu0
        %v1320 = vpop.f32.mrf.mxu0
        %1321 = vdwg.mxu0
        %v1322 = vmul.f32 %v1317, 0.5
        %v1323 = vmul.f32 %v1317, 0.70710677
        %v1324 = vand.u32 2147483647, %v1323
        %v1325 = vmul.f32 %v1324, 0.3275911
        %v1326 = vadd.f32 %v1325, 1.0
        %v1327 = vrcp.pop %v1326
        %v1328 = vmul.f32 1.0, %v1327
        %v1329 = vmul.f32 %v1328, 1.0614054
        %v1330 = vadd.f32 %v1329, -1.4531521
        %v1331 = vmul.f32 %v1330, %v1328
        %v1332 = vadd.f32 %v1331, 1.4214138
        %v1333 = vmul.f32 %v1332, %v1328
        %v1334 = vadd.f32 %v1333, -0.28449672
        %v1335 = vmul.f32 %v1334, %v1328
        %v1336 = vadd.f32 %v1335, 0.2548296
        %v1337 = vmul.f32 %v1336, %v1328
        %v1338 = vsub.f32 0.0, %v1324
        %v1339 = vmul.f32 %v1338, %v1324
        %v1340 = vmul.f32 %v1339, 1.442695
        %v1341 = vpow.pop %v1340
        %v1342 = vmul.f32 %v1337, %v1341
        %v1343 = vsub.f32 1.0, %v1342
        %vm1344 = vcmp.ge.f32.partialorder %v1323, 0.0
        %v1345 = vsub.f32 0.0, %v1343
        %v1346 = vsel %vm1344, %v1343, %v1345
        %v1347 = vadd.f32 %v1346, 1.0
        %v1348 = vmul.f32 %v1322, %v1347
        %v1349 = vpack.c.bf16 %v1348, %v1348
        %v1350 = vld [vmem:[%s12] sm:$0xf]
        %v1351 = vld [vmem:[%s12 + $0x4] sm:$0xf]
        %v1352 = vld [vmem:[%s12 + $0x8] sm:$0xf]
        %v1353 = vld [vmem:[%s12 + $0xc] sm:$0xf]
        %v1354 = vld [vmem:[%s12 + $0x10] sm:$0xf]
        %v1355 = vld [vmem:[%s12 + $0x14] sm:$0xf]
        %v1356 = vld [vmem:[%s12 + $0x18] sm:$0xf]
        %v1357 = vld [vmem:[%s12 + $0x1c] sm:$0xf]
        %v1358 = vld [vmem:[%s12 + $0x20] sm:$0xf]
        %v1359 = vld [vmem:[%s12 + $0x24] sm:$0xf]
        %v1360 = vld [vmem:[%s12 + $0x28] sm:$0xf]
        %v1361 = vld [vmem:[%s12 + $0x2c] sm:$0xf]
        %v1362 = vld [vmem:[%s12 + $0x30] sm:$0xf]
        %v1363 = vld [vmem:[%s12 + $0x34] sm:$0xf]
        %v1364 = vld [vmem:[%s12 + $0x38] sm:$0xf]
        %v1365 = vld [vmem:[%s12 + $0x3c] sm:$0xf]
        %v1366 = vld [vmem:[#allocation9] sm:$0x1]
        %v1368 = vlaneseq
        %v1369 = vshrl.u32 %v1368, 7
        %v1370 = vsub.s32 0, %v1369
        %v1371 = vrot.slane %v1366, %v1370
        %v1389 = vunpack.c.l.b16 %v1350
        %v1390 = vunpack.c.l.b16 %v1351
        %v1391 = vunpack.c.l.b16 %v1352
        %v1392 = vunpack.c.l.b16 %v1353
        %v1393 = vunpack.c.l.b16 %v1354
        %v1394 = vunpack.c.l.b16 %v1355
        %v1395 = vunpack.c.l.b16 %v1356
        %v1396 = vunpack.c.l.b16 %v1357
        %v1397 = vunpack.c.l.b16 %v1358
        %v1398 = vunpack.c.l.b16 %v1359
        %v1399 = vunpack.c.l.b16 %v1360
        %v1400 = vunpack.c.l.b16 %v1361
        %v1401 = vunpack.c.l.b16 %v1362
        %v1402 = vunpack.c.l.b16 %v1363
        %v1403 = vunpack.c.l.b16 %v1364
        %v1404 = vunpack.c.l.b16 %v1365
        %v1405 = vpack.c.b16 %v1390, %v1389
        %v1406 = vpack.c.b16 %v1392, %v1391
        %v1407 = vpack.c.b16 %v1394, %v1393
        %v1408 = vpack.c.b16 %v1396, %v1395
        %v1409 = vpack.c.b16 %v1398, %v1397
        %v1410 = vpack.c.b16 %v1400, %v1399
        %v1411 = vpack.c.b16 %v1402, %v1401
        %v1412 = vpack.c.b16 %v1404, %v1403
        %1421 = vmatprep.subr.bf16.mxu0 0
        %1422 = vmatpush1.bf16.msra.mxu0 %v1412
        %1423 = vmatprep.subr.bf16.mxu0 0
        %1424 = vmatpush1.bf16.msra.mxu0 %v1411
        %1425 = vmatprep.subr.bf16.mxu0 0
        %1426 = vmatpush1.bf16.msra.mxu0 %v1410
        %1427 = vmatprep.subr.bf16.mxu0 0
        %1428 = vmatpush1.bf16.msra.mxu0 %v1409
        %1429 = vmatprep.subr.bf16.mxu0 0
        %1430 = vmatpush1.bf16.msra.mxu0 %v1408
        %1431 = vmatprep.subr.bf16.mxu0 0
        %1432 = vmatpush1.bf16.msra.mxu0 %v1407
        %1433 = vmatprep.subr.bf16.mxu0 0
        %1434 = vmatpush1.bf16.msra.mxu0 %v1406
        %1435 = vmatprep.subr.bf16.mxu0 0
        %1436 = vmatpush1.bf16.msra.mxu0 %v1405
        %1437 = vmatprep.subr.bf16.mxu0 0
        %1438 = vmatpush2.bf16.msra.mxu0 0
        %1439 = vmatprep.subr.bf16.mxu0 0
        %1440 = vmatpush2.bf16.msra.mxu0 0
        %1441 = vmatprep.subr.bf16.mxu0 0
        %1442 = vmatpush2.bf16.msra.mxu0 0
        %1443 = vmatprep.subr.bf16.mxu0 0
        %1444 = vmatpush2.bf16.msra.mxu0 0
        %1445 = vmatprep.subr.bf16.mxu0 0
        %1446 = vmatpush2.bf16.msra.mxu0 0
        %1447 = vmatprep.subr.bf16.mxu0 0
        %1448 = vmatpush2.bf16.msra.mxu0 0
        %1449 = vmatprep.subr.bf16.mxu0 0
        %1450 = vmatpush2.bf16.msra.mxu0 0
        %1451 = vmatprep.subr.bf16.mxu0 0
        %1452 = vmatpush2.bf16.msra.mxu0 0
        %1453 = vmatprep.mubr.bf16.mxu0 0
        %1454 = vmatmul.mubr.bf16.gmra.mxu0 %v1349
        %v1455 = vpop.f32.mrf.mxu0
        %v1456 = vadd.f32 %v1371, %v1455
        %v1457 = vpop.f32.mrf.mxu0
        %v1458 = vpop.f32.mrf.mxu0
        %v1459 = vpop.f32.mrf.mxu0
        %1460 = vdwg.mxu0
        %v1461 = vadd.f32 %v1225, %v1456
        %1462 = vst.msk [vmem:[%s509] sm:$0xff] %vm518, %v1461
        %s1463 = sand.u32 %s338, 1
        %s1464 = scalar_lea.sflag [#allocation5], %s1463
        %s1465 = sand.u32 %s338, 1
        %s1466 = smul.addr %s1465, 8
        %s1467 = scalar_lea.vmem [#allocation11], %s1466
        // Predicated region
        $region93: #{block_forward.1} parent=75 // pred_check
          %p1468 = pneg %p348
        $region94: #{block_forward.1} parent=75 // pred_check_branch
          %1470 = sbr.rel (%p1468) target = $region96
        $region95: #{block_forward.1} parent=75 // pred_region
          %s1472 = ssub.s32 128, 128
          %1473 = vsyncadd %s1464, %s1472
          %s1474 = smul.addr %s31, 128
          %s1475 = scalar_lea.hbm %s14, %s1474
          %s1477 = sshll.u32 %s1467, 4
          %s1478 = int_to_ptr.vmem [resolvable:$true] %s1477
          %1480 = dma.vmem_to_hbm [thread:$0]  %s1478, 128, %s1475, %s1464
        $region96: #{block_forward.1} parent=75 // pred_fallthru
          _
      $region76: #{block_forward.1} parent=5 // pred_fallthru
        _
      %p1481 = scmp.le.s32.totalorder 2, %s26
      // Predicated region
      $region97: #{block_forward.1} parent=5 // pred_check
        %p1482 = pneg %p1481
      $region98: #{block_forward.1} parent=5 // pred_check_branch
        %1484 = sbr.rel (%p1482) target = $region100
      $region99: #{block_forward.1} parent=5 // pred_region
        %s1485 = ssub.s32 %s26, 2
        // Predicated region
        $region101: #{block_forward.1} parent=99 // pred_check
          %p1486 = pneg %p354
        $region102: #{block_forward.1} parent=99 // pred_check_branch
          %1488 = sbr.rel (%p1486) target = $region104
        $region103: #{block_forward.1} parent=99 // pred_region
          %s1489 = sand.u32 %s339, 1
          %s1490 = scalar_lea.sflag [#allocation5], %s1489
          %s1491 = sand.u32 %s339, 1
          %s1492 = smul.addr %s1491, 8
          %s1493 = scalar_lea.vmem [#allocation11], %s1492
          %1494 = dma.done %s1490, 128
        $region104: #{block_forward.1} parent=99 // pred_fallthru
          _
      $region100: #{block_forward.1} parent=5 // pred_fallthru
        _
    $region6: #{block_forward.1} parent=1 // loop_footer
      %s30 = sadd.s32 1, %s26
    $region7: #{block_forward.1} parent=1 // loop_footer_branch
      %25 = sbr.rel target = $region3
    $region8: #{block_forward.1} parent=1 // loop_exit
      _
    %1495 = vsyncpa [#allocation4], 1
    %s1496 = scalar_lea.sflag [#allocation4], 1
    %1497 = vsyncpa %s1496, 1
    %1498 = vsyncpa [#allocation7], 1
    %1499 = vsyncpa [#allocation10], 1
    %1500 = vsyncpa [#allocation5], 1
    %s1501 = scalar_lea.sflag [#allocation5], 1
    %1502 = vsyncpa %s1501, 1

</llo_original>
